<compile_context>
chip_gen: v6e
topology: v6e:2x2x1
jax: 0.10.0
libtpu: 0.0.40
codegen_flags: <defaults>
</compile_context>

<pallas_src>
import jax
import jax.numpy as jnp
import numpy as np
from jax.experimental import pallas as pl
from jax.experimental.pallas import tpu as pltpu


def graph_triple_conv_kernel(
    edges_ref, edges_t_ref, pred_ref, invc_ref, obj_ref,
    projs_ref, projo_ref, w1p_ref, b1_ref, w2_ref, b2_ref,
    w3_ref, b3_ref, w4_ref, b4_ref, wp_ref, bp_ref,
    new_obj_ref, new_p_ref,
    pooled_ref,
):
    f32 = jnp.float32
    bf16 = jnp.bfloat16
    t = pl.program_id(0)
    last = pl.num_programs(0) - 1

    N, H = projs_ref.shape
    TT = pred_ref.shape[0]
    Dout = new_p_ref.shape[1]

    @pl.when(t == 0)
    def _init():
        pooled_ref[...] = jnp.zeros_like(pooled_ref)

    # ---- gather one-hots (TT, N): exact 0/1 values, fed to the MXU in bf16.
    # Out-of-range (sentinel == N) padded triples produce all-zero one-hots.
    edges_blk = edges_ref[...]                                   # (TT, 2) int32
    s_col = edges_blk[:, 0:1]                                    # (TT, 1)
    o_col = edges_blk[:, 1:2]                                    # (TT, 1)
    iota_tn = jax.lax.broadcasted_iota(jnp.int32, (TT, N), 1)
    oh_s = (iota_tn == s_col).astype(bf16)                       # (TT, N)
    oh_o = (iota_tn == o_col).astype(bf16)                       # (TT, N)

    # ---- net1 layer 1: pre-projected object features (gather == row select)
    #      plus the predicate matmul; f32 accumulation throughout.
    h1 = jnp.dot(oh_s, projs_ref[...], preferred_element_type=f32)
    h1 = h1 + jnp.dot(pred_ref[...], w1p_ref[...], preferred_element_type=f32)
    h1 = h1 + jnp.dot(oh_o, projo_ref[...], preferred_element_type=f32)
    h1 = jnp.maximum(h1 + b1_ref[...], 0.0)                      # (TT, H) f32

    # ---- net1 layer 2: single fused (H, 2H+Dout) matmul; 128-lane-aligned slices.
    t2 = jnp.dot(h1.astype(bf16), w2_ref[...], preferred_element_type=f32)
    t2 = jnp.maximum(t2 + b2_ref[...], 0.0)                      # (TT, 2H+Dout) f32
    new_s = t2[:, :H]
    new_p = t2[:, H:H + Dout]
    new_o = t2[:, H + Dout:]
    new_p_ref[...] = new_p                                       # lane-dense store

    # ---- scatter-add pooling: (N, TT) one-hots built directly (no transposes),
    #      plain jnp.dot with f32 accumulation into the resident VMEM accumulator.
    edges_t_blk = edges_t_ref[...]                               # (2, TT) int32
    s_row = edges_t_blk[0:1, :]                                  # (1, TT)
    o_row = edges_t_blk[1:2, :]                                  # (1, TT)
    iota_nt = jax.lax.broadcasted_iota(jnp.int32, (N, TT), 0)
    ohT_s = (iota_nt == s_row).astype(bf16)                      # (N, TT)
    ohT_o = (iota_nt == o_row).astype(bf16)                      # (N, TT)
    pooled_ref[...] += (
        jnp.dot(ohT_s, new_s.astype(bf16), preferred_element_type=f32)
        + jnp.dot(ohT_o, new_o.astype(bf16), preferred_element_type=f32))

    # ---- after the last triple tile: 'avg' normalize, net2, residual projection.
    @pl.when(t == last)
    def _finalize():
        pooled = pooled_ref[...] * invc_ref[...]                 # (N, H) * (N, 1)
        h3 = jnp.maximum(
            jnp.dot(pooled.astype(bf16), w3_ref[...], preferred_element_type=f32)
            + b3_ref[...], 0.0)
        out = jnp.maximum(
            jnp.dot(h3.astype(bf16), w4_ref[...], preferred_element_type=f32)
            + b4_ref[...], 0.0)
        out = out + (jnp.dot(obj_ref[...], wp_ref[...], preferred_element_type=f32)
                     + bp_ref[...])
        new_obj_ref[...] = out


def _round_up(x, m):
    return ((x + m - 1) // m) * m


def _pick_tile(T, max_tile=1024):
    """Largest lane-aligned (multiple-of-128) triple tile <= max_tile.

    T is padded up to a multiple of the tile; padded triples are masked out via a
    sentinel object index, so no single-full-tile fallback is needed.
    """
    return int(min(max_tile, _round_up(T, 128)))


def graph_triple_conv(obj_vecs, pred_vecs, edges, params, tile_t=None):
    f32 = jnp.float32
    bf16 = jnp.bfloat16
    N, D_obj = obj_vecs.shape
    T, D_pred = pred_vecs.shape
    H = params["w3"].shape[0]
    Dout = params["w4"].shape[1]

    if tile_t is None:
        tile_t = _pick_tile(T)
    assert tile_t % 128 == 0, "triple tile must be lane-aligned (multiple of 128)"
    T_pad = _round_up(T, tile_t)
    grid_t = T_pad // tile_t

    # Pad triples to a tile multiple. Padded rows get a sentinel object index
    # (== N) so their one-hots are all-zero -> no gather/scatter contribution.
    edges_p = edges.astype(jnp.int32)
    pred_p = pred_vecs
    if T_pad != T:
        pad = T_pad - T
        edges_p = jnp.concatenate(
            [edges_p, jnp.full((pad, 2), N, jnp.int32)], axis=0)
        pred_p = jnp.concatenate(
            [pred_p, jnp.zeros((pad, D_pred), pred_vecs.dtype)], axis=0)
    edges_tr = edges_p.T                                         # (2, T_pad)
    pred_b = pred_p.astype(bf16)
    obj_b = obj_vecs.astype(bf16)

    # Inverse 'avg' counts (from the *unpadded* edges), computed once outside.
    counts = (jnp.zeros((N,), f32)
              .at[edges[:, 0]].add(1.0)
              .at[edges[:, 1]].add(1.0))
    inv_counts = (1.0 / jnp.clip(counts, 1.0, None))[:, None]    # (N, 1)

    # Pre-project the object table through w1's subject/object row blocks:
    # obj[s_idx] @ w1_s == (obj @ w1_s)[s_idx]  (grid-invariant, done once).
    w1, b1 = params["w1"], params["b1"]
    proj_s = jnp.dot(obj_vecs, w1[:D_obj],
                     preferred_element_type=f32).astype(bf16)    # (N, H)
    proj_o = jnp.dot(obj_vecs, w1[D_obj + D_pred:],
                     preferred_element_type=f32).astype(bf16)    # (N, H)
    w1_p = w1[D_obj:D_obj + D_pred].astype(bf16)

    w2 = params["w2"].astype(bf16)           # fused (H, 2H+Dout)
    b2 = params["b2"]
    w3 = params["w3"].astype(bf16)
    w4 = params["w4"].astype(bf16)
    wp = params["wp"].astype(bf16)
    b3, b4, bp = params["b3"], params["b4"], params["bp"]

    def tiled(shape, idx):                  # arrays tiled along the triples axis
        return pl.BlockSpec(shape, idx)

    def resident(shape):                    # grid-invariant operands
        return pl.BlockSpec(shape, lambda t: (0, 0))

    inputs_and_specs = [
        (edges_p,   tiled((tile_t, 2), lambda t: (t, 0))),
        (edges_tr,  tiled((2, tile_t), lambda t: (0, t))),
        (pred_b,    tiled((tile_t, D_pred), lambda t: (t, 0))),
        (inv_counts, resident((N, 1))),
        (obj_b,     resident((N, D_obj))),
        (proj_s,    resident((N, H))),
        (proj_o,    resident((N, H))),
        (w1_p,      resident(w1_p.shape)),
        (b1,        resident(b1.shape)),
        (w2,        resident(w2.shape)),
        (b2,        resident(b2.shape)),
        (w3,        resident(w3.shape)),
        (b3,        resident(b3.shape)),
        (w4,        resident(w4.shape)),
        (b4,        resident(b4.shape)),
        (wp,        resident(wp.shape)),
        (bp,        resident(bp.shape)),
    ]
    inputs = [x for x, _ in inputs_and_specs]
    in_specs = [s for _, s in inputs_and_specs]

    out_specs = (
        pl.BlockSpec((N, Dout), lambda t: (0, 0)),        # new_obj (resident)
        pl.BlockSpec((tile_t, Dout), lambda t: (t, 0)),   # new_pred (per tile)
    )
    out_shape = (
        jax.ShapeDtypeStruct((N, Dout), f32),
        jax.ShapeDtypeStruct((T_pad, Dout), f32),
    )

    flops = (
        8 * T_pad * N * H                          # one-hot gather + scatter-add
        + 2 * T_pad * D_pred * H                   # pred @ w1_p
        + 2 * T_pad * H * (2 * H + Dout)           # fused net1 layer 2
        + 2 * N * H * H + 2 * N * H * Dout         # net2
        + 2 * N * D_obj * Dout                     # residual projection
    )
    bytes_accessed = int(sum(np.prod(x.shape) * x.dtype.itemsize for x in inputs)
                         + N * Dout * 4 + T_pad * Dout * 4)

    new_obj, new_pred = pl.pallas_call(
        graph_triple_conv_kernel,
        out_shape=out_shape,
        grid_spec=pltpu.PrefetchScalarGridSpec(
            num_scalar_prefetch=0,
            grid=(grid_t,),
            in_specs=in_specs,
            out_specs=out_specs,
            scratch_shapes=[pltpu.VMEM((N, H), f32)],     # pooled accumulator
        ),
        compiler_params=pltpu.CompilerParams(
            dimension_semantics=("arbitrary",),           # reduction over triples
            vmem_limit_bytes=48 * 1024 * 1024),
        cost_estimate=pl.CostEstimate(
            flops=int(flops), transcendentals=0, bytes_accessed=bytes_accessed),
    )(*inputs)

    return new_obj, new_pred[:T]


def init_params(key, d_obj, d_pred, hidden, d_out):
    """Deterministic synthetic init (kaiming-normal-like; weights stored as (in,out))."""
    ks = jax.random.split(key, 10)
    d_in1 = 2 * d_obj + d_pred

    def kaiming(k, din, dout):
        return (jax.random.normal(k, (din, dout), jnp.float32)
                * np.sqrt(2.0 / din).astype(np.float32))

    return {
        # net1: [2*Dobj+Dpred, H, 2*H+Dout]   (Linear->ReLU->Linear->ReLU)
        "w1": kaiming(ks[0], d_in1, hidden),
        "b1": 0.01 * jax.random.normal(ks[1], (1, hidden), jnp.float32),
        "w2": kaiming(ks[2], hidden, 2 * hidden + d_out),
        "b2": 0.01 * jax.random.normal(ks[3], (1, 2 * hidden + d_out), jnp.float32),
        # net2: [H, H, Dout]
        "w3": kaiming(ks[4], hidden, hidden),
        "b3": 0.01 * jax.random.normal(ks[5], (1, hidden), jnp.float32),
        "w4": kaiming(ks[6], hidden, d_out),
        "b4": 0.01 * jax.random.normal(ks[7], (1, d_out), jnp.float32),
        # residual linear_projection: [Dobj, Dout]
        "wp": kaiming(ks[8], d_obj, d_out),
        "bp": 0.01 * jax.random.normal(ks[9], (1, d_out), jnp.float32),
    }


def reference_forward(obj_vecs, pred_vecs, edges, params):
    """Pure-JAX f32 reference of GraphTripleConv.forward (pooling='avg', residual=True)."""
    N = obj_vecs.shape[0]
    H = params["w3"].shape[0]
    Dout = params["w4"].shape[1]
    s_idx = edges[:, 0]
    o_idx = edges[:, 1]
    cur_t = jnp.concatenate(
        [obj_vecs[s_idx], pred_vecs, obj_vecs[o_idx]], axis=1)
    h1 = jax.nn.relu(cur_t @ params["w1"] + params["b1"])
    t2 = jax.nn.relu(h1 @ params["w2"] + params["b2"])
    new_s, new_p, new_o = t2[:, :H], t2[:, H:H + Dout], t2[:, H + Dout:]
    pooled = jnp.zeros((N, H), jnp.float32)
    pooled = pooled.at[s_idx].add(new_s).at[o_idx].add(new_o)
    counts = jnp.zeros((N,), jnp.float32).at[s_idx].add(1.0).at[o_idx].add(1.0)
    pooled = pooled / jnp.clip(counts, 1.0, None)[:, None]
    h3 = jax.nn.relu(pooled @ params["w3"] + params["b3"])
    out = jax.nn.relu(h3 @ params["w4"] + params["b4"])
    out = out + obj_vecs @ params["wp"] + params["bp"]
    return out, new_p


if __name__ == "__main__":
    # Small shapes consistent with the module's forward contract.
    NUM_OBJS = 8
    NUM_TRIPLES = 200   # not a tile multiple -> exercises padding/masking
    D_OBJ = 128         # input_dim_obj
    D_PRED = 128        # input_dim_pred
    HIDDEN = 128        # hidden_dim
    D_OUT = 128         # output_dim (defaults to input_dim_obj)
    TILE_T = 128        # lane-aligned tile; padded grid of 2 exercises the accumulator

    key = jax.random.PRNGKey(0)
    k_obj, k_pred, k_edge, k_par = jax.random.split(key, 4)

    obj_vecs = jax.random.normal(k_obj, (NUM_OBJS, D_OBJ), jnp.float32)
    pred_vecs = jax.random.normal(k_pred, (NUM_TRIPLES, D_PRED), jnp.float32)
    edges = jax.random.randint(k_edge, (NUM_TRIPLES, 2), 0, NUM_OBJS, jnp.int32)
    params = init_params(k_par, D_OBJ, D_PRED, HIDDEN, D_OUT)

    new_obj, new_pred = graph_triple_conv(obj_vecs, pred_vecs, edges, params,
                                          tile_t=TILE_T)
    jax.block_until_ready((new_obj, new_pred))

    ref_obj, ref_pred = reference_forward(obj_vecs, pred_vecs, edges, params)

    assert new_obj.shape == (NUM_OBJS, D_OUT) and new_pred.shape == (NUM_TRIPLES, D_OUT)
    assert bool(jnp.all(jnp.isfinite(new_obj))) and bool(jnp.all(jnp.isfinite(new_pred)))
    # Loose tolerance: all MXU matmuls take bf16 operands (f32 accumulation), so
    # results differ slightly from the f32 XLA reference.
    assert np.allclose(np.asarray(new_obj), np.asarray(ref_obj), rtol=5e-2, atol=5e-2)
    assert np.allclose(np.asarray(new_pred), np.asarray(ref_pred), rtol=5e-2, atol=5e-2)

    print("KERNEL_OK")
</pallas_src>

<mosaic_0001>
module attributes {stable_mosaic.version = 11 : i64} {
  func.func @graph_triple_conv_kernel(%arg0: i32, %arg1: memref<128x2xi32, #tpu.memory_space<vmem>>, %arg2: memref<2x128xi32, #tpu.memory_space<vmem>>, %arg3: memref<128x128xbf16, #tpu.memory_space<vmem>>, %arg4: memref<8x1xf32, #tpu.memory_space<vmem>>, %arg5: memref<8x128xbf16, #tpu.memory_space<vmem>>, %arg6: memref<8x128xbf16, #tpu.memory_space<vmem>>, %arg7: memref<8x128xbf16, #tpu.memory_space<vmem>>, %arg8: memref<128x128xbf16, #tpu.memory_space<vmem>>, %arg9: memref<1x128xf32, #tpu.memory_space<vmem>>, %arg10: memref<128x384xbf16, #tpu.memory_space<vmem>>, %arg11: memref<1x384xf32, #tpu.memory_space<vmem>>, %arg12: memref<128x128xbf16, #tpu.memory_space<vmem>>, %arg13: memref<1x128xf32, #tpu.memory_space<vmem>>, %arg14: memref<128x128xbf16, #tpu.memory_space<vmem>>, %arg15: memref<1x128xf32, #tpu.memory_space<vmem>>, %arg16: memref<128x128xbf16, #tpu.memory_space<vmem>>, %arg17: memref<1x128xf32, #tpu.memory_space<vmem>>, %arg18: memref<8x128xf32, #tpu.memory_space<vmem>>, %arg19: memref<128x128xf32, #tpu.memory_space<vmem>>, %arg20: memref<8x128xf32, #tpu.memory_space<vmem>>) attributes {dimension_semantics = [#tpu.dimension_semantics<arbitrary>], iteration_bounds = array<i64: 2>, scalar_prefetch = 0 : i64, scratch_operands = 1 : i64, tpu.core_type = #tpu.core_type<tc>, window_params = [{transform_indices = @transform_0, window_bounds = array<i64: 128, 2>}, {transform_indices = @transform_1, window_bounds = array<i64: 2, 128>}, {transform_indices = @transform_2, window_bounds = array<i64: 128, 128>}, {pipeline_mode = #tpu.pipeline_mode<synchronous>, transform_indices = @transform_3, window_bounds = array<i64: 8, 1>}, {pipeline_mode = #tpu.pipeline_mode<synchronous>, transform_indices = @transform_4, window_bounds = array<i64: 8, 128>}, {pipeline_mode = #tpu.pipeline_mode<synchronous>, transform_indices = @transform_5, window_bounds = array<i64: 8, 128>}, {pipeline_mode = #tpu.pipeline_mode<synchronous>, transform_indices = @transform_6, window_bounds = array<i64: 8, 128>}, {pipeline_mode = #tpu.pipeline_mode<synchronous>, transform_indices = @transform_7, window_bounds = array<i64: 128, 128>}, {pipeline_mode = #tpu.pipeline_mode<synchronous>, transform_indices = @transform_8, window_bounds = array<i64: 1, 128>}, {pipeline_mode = #tpu.pipeline_mode<synchronous>, transform_indices = @transform_9, window_bounds = array<i64: 128, 384>}, {pipeline_mode = #tpu.pipeline_mode<synchronous>, transform_indices = @transform_10, window_bounds = array<i64: 1, 384>}, {pipeline_mode = #tpu.pipeline_mode<synchronous>, transform_indices = @transform_11, window_bounds = array<i64: 128, 128>}, {pipeline_mode = #tpu.pipeline_mode<synchronous>, transform_indices = @transform_12, window_bounds = array<i64: 1, 128>}, {pipeline_mode = #tpu.pipeline_mode<synchronous>, transform_indices = @transform_13, window_bounds = array<i64: 128, 128>}, {pipeline_mode = #tpu.pipeline_mode<synchronous>, transform_indices = @transform_14, window_bounds = array<i64: 1, 128>}, {pipeline_mode = #tpu.pipeline_mode<synchronous>, transform_indices = @transform_15, window_bounds = array<i64: 128, 128>}, {pipeline_mode = #tpu.pipeline_mode<synchronous>, transform_indices = @transform_16, window_bounds = array<i64: 1, 128>}, {pipeline_mode = #tpu.pipeline_mode<synchronous>, transform_indices = @transform_17, window_bounds = array<i64: 8, 128>}, {transform_indices = @transform_18, window_bounds = array<i64: 128, 128>}]} {
    %c0_i32 = arith.constant 0 : i32
    %0 = arith.cmpi eq, %arg0, %c0_i32 : i32
    %1 = arith.extui %0 : i1 to i32
    %c0_i32_0 = arith.constant 0 : i32
    %2 = arith.cmpi ne, %1, %c0_i32_0 : i32
    scf.if %2 {
      %cst_32 = arith.constant 0.000000e+00 : f32
      %68 = vector.broadcast %cst_32 : f32 to vector<8x128xf32>
      %c0_33 = arith.constant 0 : index
      %c0_34 = arith.constant 0 : index
      %69 = vector.load %arg20[%c0_33, %c0_34] : memref<8x128xf32, #tpu.memory_space<vmem>>, vector<8x128xf32>
      tpu.vector_store %arg20[%c0_33, %c0_34], %68 {strides = array<i32>} : memref<8x128xf32, #tpu.memory_space<vmem>>, vector<8x128xf32>,
    } else {
    }
    %c0 = arith.constant 0 : index
    %c0_1 = arith.constant 0 : index
    %3 = vector.load %arg1[%c0, %c0_1] : memref<128x2xi32, #tpu.memory_space<vmem>>, vector<128x2xi32>
    %4 = vector.extract_strided_slice %3 {offsets = [0, 0], sizes = [128, 1], strides = [1, 1]} : vector<128x2xi32> to vector<128x1xi32>
    %5 = vector.extract_strided_slice %3 {offsets = [0, 1], sizes = [128, 1], strides = [1, 1]} : vector<128x2xi32> to vector<128x1xi32>
    %6 = tpu.iota {dimensions = array<i32: 1>} : vector<128x8xi32>
    %7 = vector.broadcast %4 : vector<128x1xi32> to vector<128x8xi32>
    %8 = arith.cmpi eq, %6, %7 : vector<128x8xi32>
    %9 = arith.extui %8 : vector<128x8xi1> to vector<128x8xi32>
    %10 = arith.sitofp %9 : vector<128x8xi32> to vector<128x8xf32>
    %11 = arith.truncf %10 : vector<128x8xf32> to vector<128x8xbf16>
    %12 = vector.broadcast %5 : vector<128x1xi32> to vector<128x8xi32>
    %13 = arith.cmpi eq, %6, %12 : vector<128x8xi32>
    %14 = arith.extui %13 : vector<128x8xi1> to vector<128x8xi32>
    %15 = arith.sitofp %14 : vector<128x8xi32> to vector<128x8xf32>
    %16 = arith.truncf %15 : vector<128x8xf32> to vector<128x8xbf16>
    %c0_2 = arith.constant 0 : index
    %c0_3 = arith.constant 0 : index
    %17 = vector.load %arg6[%c0_2, %c0_3] : memref<8x128xbf16, #tpu.memory_space<vmem>>, vector<8x128xbf16>
    %cst = arith.constant dense<0.000000e+00> : vector<128x128xf32>
    %18 = tpu.matmul %11, %17, %cst {dimension_numbers = #tpu.dot_dimension_numbers<[1], [0], [0], [1], [0, 0, 1, 1], [], []>} : vector<128x8xbf16>, vector<8x128xbf16>, vector<128x128xf32> -> vector<128x128xf32>
    %c0_4 = arith.constant 0 : index
    %c0_5 = arith.constant 0 : index
    %19 = vector.load %arg3[%c0_4, %c0_5] : memref<128x128xbf16, #tpu.memory_space<vmem>>, vector<128x128xbf16>
    %c0_6 = arith.constant 0 : index
    %c0_7 = arith.constant 0 : index
    %20 = vector.load %arg8[%c0_6, %c0_7] : memref<128x128xbf16, #tpu.memory_space<vmem>>, vector<128x128xbf16>
    %cst_8 = arith.constant dense<0.000000e+00> : vector<128x128xf32>
    %21 = tpu.matmul %19, %20, %cst_8 {dimension_numbers = #tpu.dot_dimension_numbers<[1], [0], [0], [1], [0, 0, 1, 1], [], []>} : vector<128x128xbf16>, vector<128x128xbf16>, vector<128x128xf32> -> vector<128x128xf32>
    %22 = arith.addf %18, %21 : vector<128x128xf32>
    %c0_9 = arith.constant 0 : index
    %c0_10 = arith.constant 0 : index
    %23 = vector.load %arg7[%c0_9, %c0_10] : memref<8x128xbf16, #tpu.memory_space<vmem>>, vector<8x128xbf16>
    %cst_11 = arith.constant dense<0.000000e+00> : vector<128x128xf32>
    %24 = tpu.matmul %16, %23, %cst_11 {dimension_numbers = #tpu.dot_dimension_numbers<[1], [0], [0], [1], [0, 0, 1, 1], [], []>} : vector<128x8xbf16>, vector<8x128xbf16>, vector<128x128xf32> -> vector<128x128xf32>
    %25 = arith.addf %22, %24 : vector<128x128xf32>
    %c0_12 = arith.constant 0 : index
    %c0_13 = arith.constant 0 : index
    %26 = vector.load %arg9[%c0_12, %c0_13] : memref<1x128xf32, #tpu.memory_space<vmem>>, vector<1x128xf32>
    %27 = vector.broadcast %26 : vector<1x128xf32> to vector<128x128xf32>
    %28 = arith.addf %25, %27 : vector<128x128xf32>
    %cst_14 = arith.constant 0.000000e+00 : f32
    %29 = vector.broadcast %cst_14 : f32 to vector<128x128xf32>
    %30 = arith.maximumf %28, %29 : vector<128x128xf32>
    %31 = arith.truncf %30 : vector<128x128xf32> to vector<128x128xbf16>
    %c0_15 = arith.constant 0 : index
    %c0_16 = arith.constant 0 : index
    %32 = vector.load %arg10[%c0_15, %c0_16] : memref<128x384xbf16, #tpu.memory_space<vmem>>, vector<128x384xbf16>
    %cst_17 = arith.constant dense<0.000000e+00> : vector<128x384xf32>
    %33 = tpu.matmul %31, %32, %cst_17 {dimension_numbers = #tpu.dot_dimension_numbers<[1], [0], [0], [1], [0, 0, 1, 1], [], []>} : vector<128x128xbf16>, vector<128x384xbf16>, vector<128x384xf32> -> vector<128x384xf32>
    %c0_18 = arith.constant 0 : index
    %c0_19 = arith.constant 0 : index
    %34 = vector.load %arg11[%c0_18, %c0_19] : memref<1x384xf32, #tpu.memory_space<vmem>>, vector<1x384xf32>
    %35 = vector.broadcast %34 : vector<1x384xf32> to vector<128x384xf32>
    %36 = arith.addf %33, %35 : vector<128x384xf32>
    %cst_20 = arith.constant 0.000000e+00 : f32
    %37 = vector.broadcast %cst_20 : f32 to vector<128x384xf32>
    %38 = arith.maximumf %36, %37 : vector<128x384xf32>
    %39 = vector.extract_strided_slice %38 {offsets = [0, 0], sizes = [128, 128], strides = [1, 1]} : vector<128x384xf32> to vector<128x128xf32>
    %40 = vector.extract_strided_slice %38 {offsets = [0, 128], sizes = [128, 128], strides = [1, 1]} : vector<128x384xf32> to vector<128x128xf32>
    %41 = vector.extract_strided_slice %38 {offsets = [0, 256], sizes = [128, 128], strides = [1, 1]} : vector<128x384xf32> to vector<128x128xf32>
    %c0_21 = arith.constant 0 : index
    %c0_22 = arith.constant 0 : index
    %42 = vector.load %arg19[%c0_21, %c0_22] : memref<128x128xf32, #tpu.memory_space<vmem>>, vector<128x128xf32>
    tpu.vector_store %arg19[%c0_21, %c0_22], %40 {strides = array<i32>} : memref<128x128xf32, #tpu.memory_space<vmem>>, vector<128x128xf32>,
    %c0_23 = arith.constant 0 : index
    %c0_24 = arith.constant 0 : index
    %43 = vector.load %arg2[%c0_23, %c0_24] : memref<2x128xi32, #tpu.memory_space<vmem>>, vector<2x128xi32>
    %44 = vector.extract_strided_slice %43 {offsets = [0, 0], sizes = [1, 128], strides = [1, 1]} : vector<2x128xi32> to vector<1x128xi32>
    %45 = vector.extract_strided_slice %43 {offsets = [1, 0], sizes = [1, 128], strides = [1, 1]} : vector<2x128xi32> to vector<1x128xi32>
    %46 = tpu.iota {dimensions = array<i32: 0>} : vector<8x128xi32>
    %47 = vector.broadcast %44 : vector<1x128xi32> to vector<8x128xi32>
    %48 = arith.cmpi eq, %46, %47 : vector<8x128xi32>
    %49 = arith.extui %48 : vector<8x128xi1> to vector<8x128xi32>
    %50 = arith.sitofp %49 : vector<8x128xi32> to vector<8x128xf32>
    %51 = arith.truncf %50 : vector<8x128xf32> to vector<8x128xbf16>
    %52 = vector.broadcast %45 : vector<1x128xi32> to vector<8x128xi32>
    %53 = arith.cmpi eq, %46, %52 : vector<8x128xi32>
    %54 = arith.extui %53 : vector<8x128xi1> to vector<8x128xi32>
    %55 = arith.sitofp %54 : vector<8x128xi32> to vector<8x128xf32>
    %56 = arith.truncf %55 : vector<8x128xf32> to vector<8x128xbf16>
    %c0_25 = arith.constant 0 : index
    %c0_26 = arith.constant 0 : index
    %57 = vector.load %arg20[%c0_25, %c0_26] : memref<8x128xf32, #tpu.memory_space<vmem>>, vector<8x128xf32>
    %58 = arith.truncf %39 : vector<128x128xf32> to vector<128x128xbf16>
    %cst_27 = arith.constant dense<0.000000e+00> : vector<8x128xf32>
    %59 = tpu.matmul %51, %58, %cst_27 {dimension_numbers = #tpu.dot_dimension_numbers<[1], [0], [0], [1], [0, 0, 1, 1], [], []>} : vector<8x128xbf16>, vector<128x128xbf16>, vector<8x128xf32> -> vector<8x128xf32>
    %60 = arith.truncf %41 : vector<128x128xf32> to vector<128x128xbf16>
    %cst_28 = arith.constant dense<0.000000e+00> : vector<8x128xf32>
    %61 = tpu.matmul %56, %60, %cst_28 {dimension_numbers = #tpu.dot_dimension_numbers<[1], [0], [0], [1], [0, 0, 1, 1], [], []>} : vector<8x128xbf16>, vector<128x128xbf16>, vector<8x128xf32> -> vector<8x128xf32>
    %62 = arith.addf %59, %61 : vector<8x128xf32>
    %63 = arith.addf %57, %62 : vector<8x128xf32>
    %c0_29 = arith.constant 0 : index
    %c0_30 = arith.constant 0 : index
    %64 = vector.load %arg20[%c0_29, %c0_30] : memref<8x128xf32, #tpu.memory_space<vmem>>, vector<8x128xf32>
    tpu.vector_store %arg20[%c0_29, %c0_30], %63 {strides = array<i32>} : memref<8x128xf32, #tpu.memory_space<vmem>>, vector<8x128xf32>,
    %c1_i32 = arith.constant 1 : i32
    %65 = arith.cmpi eq, %arg0, %c1_i32 : i32
    %66 = arith.extui %65 : i1 to i32
    %c0_i32_31 = arith.constant 0 : i32
    %67 = arith.cmpi ne, %66, %c0_i32_31 : i32
    scf.if %67 {
      %c0_32 = arith.constant 0 : index
      %c0_33 = arith.constant 0 : index
      %68 = vector.load %arg20[%c0_32, %c0_33] : memref<8x128xf32, #tpu.memory_space<vmem>>, vector<8x128xf32>
      %c0_34 = arith.constant 0 : index
      %c0_35 = arith.constant 0 : index
      %69 = vector.load %arg4[%c0_34, %c0_35] : memref<8x1xf32, #tpu.memory_space<vmem>>, vector<8x1xf32>
      %70 = vector.broadcast %69 : vector<8x1xf32> to vector<8x128xf32>
      %71 = arith.mulf %68, %70 : vector<8x128xf32>
      %72 = arith.truncf %71 : vector<8x128xf32> to vector<8x128xbf16>
      %c0_36 = arith.constant 0 : index
      %c0_37 = arith.constant 0 : index
      %73 = vector.load %arg12[%c0_36, %c0_37] : memref<128x128xbf16, #tpu.memory_space<vmem>>, vector<128x128xbf16>
      %cst_38 = arith.constant dense<0.000000e+00> : vector<8x128xf32>
      %74 = tpu.matmul %72, %73, %cst_38 {dimension_numbers = #tpu.dot_dimension_numbers<[1], [0], [0], [1], [0, 0, 1, 1], [], []>} : vector<8x128xbf16>, vector<128x128xbf16>, vector<8x128xf32> -> vector<8x128xf32>
      %c0_39 = arith.constant 0 : index
      %c0_40 = arith.constant 0 : index
      %75 = vector.load %arg13[%c0_39, %c0_40] : memref<1x128xf32, #tpu.memory_space<vmem>>, vector<1x128xf32>
      %76 = vector.broadcast %75 : vector<1x128xf32> to vector<8x128xf32>
      %77 = arith.addf %74, %76 : vector<8x128xf32>
      %cst_41 = arith.constant 0.000000e+00 : f32
      %78 = vector.broadcast %cst_41 : f32 to vector<8x128xf32>
      %79 = arith.maximumf %77, %78 : vector<8x128xf32>
      %80 = arith.truncf %79 : vector<8x128xf32> to vector<8x128xbf16>
      %c0_42 = arith.constant 0 : index
      %c0_43 = arith.constant 0 : index
      %81 = vector.load %arg14[%c0_42, %c0_43] : memref<128x128xbf16, #tpu.memory_space<vmem>>, vector<128x128xbf16>
      %cst_44 = arith.constant dense<0.000000e+00> : vector<8x128xf32>
      %82 = tpu.matmul %80, %81, %cst_44 {dimension_numbers = #tpu.dot_dimension_numbers<[1], [0], [0], [1], [0, 0, 1, 1], [], []>} : vector<8x128xbf16>, vector<128x128xbf16>, vector<8x128xf32> -> vector<8x128xf32>
      %c0_45 = arith.constant 0 : index
      %c0_46 = arith.constant 0 : index
      %83 = vector.load %arg15[%c0_45, %c0_46] : memref<1x128xf32, #tpu.memory_space<vmem>>, vector<1x128xf32>
      %84 = vector.broadcast %83 : vector<1x128xf32> to vector<8x128xf32>
      %85 = arith.addf %82, %84 : vector<8x128xf32>
      %cst_47 = arith.constant 0.000000e+00 : f32
      %86 = vector.broadcast %cst_47 : f32 to vector<8x128xf32>
      %87 = arith.maximumf %85, %86 : vector<8x128xf32>
      %c0_48 = arith.constant 0 : index
      %c0_49 = arith.constant 0 : index
      %88 = vector.load %arg5[%c0_48, %c0_49] : memref<8x128xbf16, #tpu.memory_space<vmem>>, vector<8x128xbf16>
      %c0_50 = arith.constant 0 : index
      %c0_51 = arith.constant 0 : index
      %89 = vector.load %arg16[%c0_50, %c0_51] : memref<128x128xbf16, #tpu.memory_space<vmem>>, vector<128x128xbf16>
      %cst_52 = arith.constant dense<0.000000e+00> : vector<8x128xf32>
      %90 = tpu.matmul %88, %89, %cst_52 {dimension_numbers = #tpu.dot_dimension_numbers<[1], [0], [0], [1], [0, 0, 1, 1], [], []>} : vector<8x128xbf16>, vector<128x128xbf16>, vector<8x128xf32> -> vector<8x128xf32>
      %c0_53 = arith.constant 0 : index
      %c0_54 = arith.constant 0 : index
      %91 = vector.load %arg17[%c0_53, %c0_54] : memref<1x128xf32, #tpu.memory_space<vmem>>, vector<1x128xf32>
      %92 = vector.broadcast %91 : vector<1x128xf32> to vector<8x128xf32>
      %93 = arith.addf %90, %92 : vector<8x128xf32>
      %94 = arith.addf %87, %93 : vector<8x128xf32>
      %c0_55 = arith.constant 0 : index
      %c0_56 = arith.constant 0 : index
      %95 = vector.load %arg18[%c0_55, %c0_56] : memref<8x128xf32, #tpu.memory_space<vmem>>, vector<8x128xf32>
      tpu.vector_store %arg18[%c0_55, %c0_56], %94 {strides = array<i32>} : memref<8x128xf32, #tpu.memory_space<vmem>>, vector<8x128xf32>,
    } else {
    }
    return
  }
  func.func @transform_0(%arg0: i32) -> (i32, i32) {
    %c0_i32 = arith.constant 0 : i32
    %c0_i32_0 = arith.constant 0 : i32
    return %arg0, %c0_i32 : i32, i32
  }
  func.func @transform_1(%arg0: i32) -> (i32, i32) {
    %c0_i32 = arith.constant 0 : i32
    %c0_i32_0 = arith.constant 0 : i32
    return %c0_i32, %arg0 : i32, i32
  }
  func.func @transform_2(%arg0: i32) -> (i32, i32) {
    %c0_i32 = arith.constant 0 : i32
    %c0_i32_0 = arith.constant 0 : i32
    return %arg0, %c0_i32 : i32, i32
  }
  func.func @transform_3(%arg0: i32) -> (i32, i32) {
    %c0_i32 = arith.constant 0 : i32
    %c0_i32_0 = arith.constant 0 : i32
    %c0_i32_1 = arith.constant 0 : i32
    return %c0_i32, %c0_i32_0 : i32, i32
  }
  func.func @transform_4(%arg0: i32) -> (i32, i32) {
    %c0_i32 = arith.constant 0 : i32
    %c0_i32_0 = arith.constant 0 : i32
    %c0_i32_1 = arith.constant 0 : i32
    return %c0_i32, %c0_i32_0 : i32, i32
  }
  func.func @transform_5(%arg0: i32) -> (i32, i32) {
    %c0_i32 = arith.constant 0 : i32
    %c0_i32_0 = arith.constant 0 : i32
    %c0_i32_1 = arith.constant 0 : i32
    return %c0_i32, %c0_i32_0 : i32, i32
  }
  func.func @transform_6(%arg0: i32) -> (i32, i32) {
    %c0_i32 = arith.constant 0 : i32
    %c0_i32_0 = arith.constant 0 : i32
    %c0_i32_1 = arith.constant 0 : i32
    return %c0_i32, %c0_i32_0 : i32, i32
  }
  func.func @transform_7(%arg0: i32) -> (i32, i32) {
    %c0_i32 = arith.constant 0 : i32
    %c0_i32_0 = arith.constant 0 : i32
    %c0_i32_1 = arith.constant 0 : i32
    return %c0_i32, %c0_i32_0 : i32, i32
  }
  func.func @transform_8(%arg0: i32) -> (i32, i32) {
    %c0_i32 = arith.constant 0 : i32
    %c0_i32_0 = arith.constant 0 : i32
    %c0_i32_1 = arith.constant 0 : i32
    return %c0_i32, %c0_i32_0 : i32, i32
  }
  func.func @transform_9(%arg0: i32) -> (i32, i32) {
    %c0_i32 = arith.constant 0 : i32
    %c0_i32_0 = arith.constant 0 : i32
    %c0_i32_1 = arith.constant 0 : i32
    return %c0_i32, %c0_i32_0 : i32, i32
  }
  func.func @transform_10(%arg0: i32) -> (i32, i32) {
    %c0_i32 = arith.constant 0 : i32
    %c0_i32_0 = arith.constant 0 : i32
    %c0_i32_1 = arith.constant 0 : i32
    return %c0_i32, %c0_i32_0 : i32, i32
  }
  func.func @transform_11(%arg0: i32) -> (i32, i32) {
    %c0_i32 = arith.constant 0 : i32
    %c0_i32_0 = arith.constant 0 : i32
    %c0_i32_1 = arith.constant 0 : i32
    return %c0_i32, %c0_i32_0 : i32, i32
  }
  func.func @transform_12(%arg0: i32) -> (i32, i32) {
    %c0_i32 = arith.constant 0 : i32
    %c0_i32_0 = arith.constant 0 : i32
    %c0_i32_1 = arith.constant 0 : i32
    return %c0_i32, %c0_i32_0 : i32, i32
  }
  func.func @transform_13(%arg0: i32) -> (i32, i32) {
    %c0_i32 = arith.constant 0 : i32
    %c0_i32_0 = arith.constant 0 : i32
    %c0_i32_1 = arith.constant 0 : i32
    return %c0_i32, %c0_i32_0 : i32, i32
  }
  func.func @transform_14(%arg0: i32) -> (i32, i32) {
    %c0_i32 = arith.constant 0 : i32
    %c0_i32_0 = arith.constant 0 : i32
    %c0_i32_1 = arith.constant 0 : i32
    return %c0_i32, %c0_i32_0 : i32, i32
  }
  func.func @transform_15(%arg0: i32) -> (i32, i32) {
    %c0_i32 = arith.constant 0 : i32
    %c0_i32_0 = arith.constant 0 : i32
    %c0_i32_1 = arith.constant 0 : i32
    return %c0_i32, %c0_i32_0 : i32, i32
  }
  func.func @transform_16(%arg0: i32) -> (i32, i32) {
    %c0_i32 = arith.constant 0 : i32
    %c0_i32_0 = arith.constant 0 : i32
    %c0_i32_1 = arith.constant 0 : i32
    return %c0_i32, %c0_i32_0 : i32, i32
  }
  func.func @transform_17(%arg0: i32) -> (i32, i32) {
    %c0_i32 = arith.constant 0 : i32
    %c0_i32_0 = arith.constant 0 : i32
    %c0_i32_1 = arith.constant 0 : i32
    return %c0_i32, %c0_i32_0 : i32, i32
  }
  func.func @transform_18(%arg0: i32) -> (i32, i32) {
    %c0_i32 = arith.constant 0 : i32
    %c0_i32_0 = arith.constant 0 : i32
    return %arg0, %c0_i32 : i32, i32
  }
}

</mosaic_0001>

<llo_original>
// kernel: tpu_custom_call.1
$region0: #{tpu_custom_call.1}
  #allocation0 [shape = 'u32[]', space=smem, size = 0x4, offset = 0x4, fixed_abs, tag = 'smem constant byte address 0x4 - core index']
  #allocation1 [shape = 'u32[144,128]{1,0:T(1,128)}', space=vmem, size = 0x12000, scoped, tag = 'internal scratch']
  #allocation2 [shape = 'f32[8,128]{1,0:T(8,128)}', space=vmem, size = 0x1000, scoped, tag = 'scratch operand']
  %s0 = inlined_call_operand.vmem [shape: s32[256,2], index: 0, kind: input, shape index: {}]
  %s1 = inlined_call_operand.vmem [shape: s32[2,256], index: 1, kind: input, shape index: {}]
  %s2 = inlined_call_operand.hbm [shape: bf16[256,128], index: 2, kind: input, shape index: {}]
  %s3 = inlined_call_operand.vmem [shape: f32[8,1], index: 3, kind: input, shape index: {}]
  %s4 = inlined_call_operand.vmem [shape: bf16[8,128], index: 4, kind: input, shape index: {}]
  %s5 = inlined_call_operand.vmem [shape: bf16[8,128], index: 5, kind: input, shape index: {}]
  %s6 = inlined_call_operand.vmem [shape: bf16[8,128], index: 6, kind: input, shape index: {}]
  %s7 = inlined_call_operand.vmem [shape: bf16[128,128], index: 7, kind: input, shape index: {}]
  %s8 = inlined_call_operand.vmem [shape: f32[1,128], index: 8, kind: input, shape index: {}]
  %s9 = inlined_call_operand.vmem [shape: bf16[128,384], index: 9, kind: input, shape index: {}]
  %s10 = inlined_call_operand.vmem [shape: f32[1,384], index: 10, kind: input, shape index: {}]
  %s11 = inlined_call_operand.hbm [shape: bf16[128,128], index: 11, kind: input, shape index: {}]
  %s12 = inlined_call_operand.vmem [shape: f32[1,128], index: 12, kind: input, shape index: {}]
  %s13 = inlined_call_operand.hbm [shape: bf16[128,128], index: 13, kind: input, shape index: {}]
  %s14 = inlined_call_operand.vmem [shape: f32[1,128], index: 14, kind: input, shape index: {}]
  %s15 = inlined_call_operand.hbm [shape: bf16[128,128], index: 15, kind: input, shape index: {}]
  %s16 = inlined_call_operand.vmem [shape: f32[1,128], index: 16, kind: input, shape index: {}]
  %s17 = inlined_call_operand.hbm [shape: f32[8,128], index: 17, kind: output, shape index: {0}]
  %s18 = inlined_call_operand.hbm [shape: f32[256,128], index: 18, kind: output, shape index: {1}]
  %19 = xla_tuple %s17, %s18
  %s20 = sld [smem:[#allocation0]]
  $region133: #{tpu_custom_call.1} parent=0
    _
  %s22 = ssub.s32 1, %s20
  %s23 = scalar_select 0, %s22, %s20
  $region1: #{tpu_custom_call.1} parent=0
    #allocation3 [shape = 'u8[65536]{0}', space=vmem, size = 0x10000, scoped, tag = 'input window, operand 2']
    #allocation4 [shape = 's32[2]{0}', space=sflag, size = 0x8, scoped, tag = 'scoped memory for tpu_custom_call.1']
    #allocation5 [shape = 's32[2]{0}', space=sflag, size = 0x8, scoped, tag = 'scoped memory for tpu_custom_call.1']
    #allocation6 [shape = 'u8[32768]{0}', space=vmem, size = 0x8000, scoped, tag = 'input window, operand 11, single buffered']
    #allocation7 [shape = 's32[1]{0}', space=sflag, size = 0x4, scoped, tag = 'scoped memory for tpu_custom_call.1']
    #allocation8 [shape = 'u8[32768]{0}', space=vmem, size = 0x8000, scoped, tag = 'input window, operand 13, single buffered']
    #allocation9 [shape = 'u8[32768]{0}', space=vmem, size = 0x8000, scoped, tag = 'input window, operand 15, single buffered']
    #allocation10 [shape = 's32[1]{0}', space=sflag, size = 0x4, scoped, tag = 'scoped memory for tpu_custom_call.1']
    #allocation11 [shape = 'u8[4096]{0}', space=vmem, size = 0x1000, scoped, tag = 'output window, operand 0, single buffered']
    #allocation12 [shape = 'u8[131072]{0}', space=vmem, size = 0x20000, scoped, tag = 'output window, operand 1']
    #allocation13 [shape = 's32[2]{0}', space=sflag, size = 0x8, scoped, tag = 'scoped memory for tpu_custom_call.1']
    %24 = vsyncpa [#allocation4], 0
    %s25 = scalar_lea.sflag [#allocation4], 1
    %26 = vsyncpa %s25, 0
    %27 = vsyncpa [#allocation7], 0
    %28 = vsyncpa [#allocation10], 0
    %29 = vsyncpa [#allocation5], 0
    %30 = vsyncpa [#allocation13], 0
    %s31 = scalar_lea.sflag [#allocation13], 1
    %32 = vsyncpa %s31, 0
    loop: start=0, step=1, limit=4
    $region2: #{tpu_custom_call.1} parent=1 // loop_pre_header
      _
    $region3: #{tpu_custom_call.1} parent=1 // loop_header
      %s34 = sphi 0, %s38
      %p35 = scmp.ge.s32.totalorder %s34, 4
      %s44 = sphi 0, %s46
      %s47 = sphi 0, %s44
      %s48 = sphi 0, %s47
      %s64 = sphi 0, %s48
      %s70 = sphi 0, %s72
      %s73 = sphi 0, %s70
      %s74 = sphi 0, %s73
      %s90 = sphi 0, %s74
      %s96 = sphi 0, %s98
      %s99 = sphi 0, %s96
      %s100 = sphi 0, %s99
      %s116 = sphi 0, %s100
      %s120 = sphi 0, %s120
      %s122 = sphi 0, %s120
      %s123 = sphi 0, %s122
      %s137 = sphi 0, %s123
      %s141 = sphi 0, %s141
      %s143 = sphi 0, %s141
      %s144 = sphi 0, %s143
      %s158 = sphi 0, %s144
      %s162 = sphi 0, %s162
      %s164 = sphi 0, %s162
      %s165 = sphi 0, %s164
      %s179 = sphi 0, %s165
      %s183 = sphi 0, %s183
      %s185 = sphi 0, %s183
      %s186 = sphi 0, %s185
      %s200 = sphi 0, %s186
      %s204 = sphi 0, %s204
      %s206 = sphi 0, %s204
      %s207 = sphi 0, %s206
      %s221 = sphi 0, %s207
      %s225 = sphi 0, %s225
      %s227 = sphi 0, %s225
      %s228 = sphi 0, %s227
      %s242 = sphi 0, %s228
      %s246 = sphi 0, %s246
      %s248 = sphi 0, %s246
      %s249 = sphi 0, %s248
      %s263 = sphi 0, %s249
      %s267 = sphi 0, %s267
      %s269 = sphi 0, %s267
      %s270 = sphi 0, %s269
      %s284 = sphi 0, %s270
      %s288 = sphi 0, %s288
      %s290 = sphi 0, %s288
      %s291 = sphi 0, %s290
      %s305 = sphi 0, %s291
      %s309 = sphi 0, %s309
      %s311 = sphi 0, %s309
      %s312 = sphi 0, %s311
      %s326 = sphi 0, %s312
      %s330 = sphi 0, %s330
      %s332 = sphi 0, %s330
      %s333 = sphi 0, %s332
      %s347 = sphi 0, %s333
      %s351 = sphi 0, %s351
      %s353 = sphi 0, %s351
      %s354 = sphi 0, %s353
      %s368 = sphi 0, %s354
      %s372 = sphi 0, %s372
      %s374 = sphi 0, %s372
      %s375 = sphi 0, %s374
      %s389 = sphi 0, %s375
      %s393 = sphi 0, %s393
      %s395 = sphi 0, %s393
      %s396 = sphi 0, %s395
      %s410 = sphi 0, %s396
      %s414 = sphi 0, %s414
      %s416 = sphi 0, %s414
      %s417 = sphi 0, %s416
      %s431 = sphi 0, %s417
      %s437 = sphi 0, %s439
      %s440 = sphi 0, %s437
      %s441 = sphi 0, %s440
      %s457 = sphi 0, %s441
    $region4: #{tpu_custom_call.1} parent=1 // loop_header_branch
      %37 = sbr.rel (%p35) target = $region8
    $region5: #{tpu_custom_call.1} parent=1 // loop_body
      %s39 = ssub.s32 %s34, 1
      %s40 = ssub.s32 %s34, 2
      %s41 = sadd.s32 %s34, 1
      %s42 = ssub.s32 %s34, %s41
      %p43 = scmp.eq.s32.totalorder %s42, 0
      %s45 = sadd.s32 %s44, 1
      %s46 = scalar_select %p43, %s44, %s45
      %p49 = pneg %p43
      %p50 = scmp.eq.s32.totalorder %s34, 1
      %p51 = por %p49, %p50
      %p52 = scmp.ne.s32.totalorder %s44, %s47
      %p53 = scmp.eq.s32.totalorder %s34, 0
      %p54 = por %p52, %p53
      %p55 = scmp.ne.s32.totalorder %s44, %s47
      %p56 = scmp.eq.s32.totalorder %s39, 1
      %p57 = por %p55, %p56
      %p58 = scmp.ne.s32.totalorder %s47, %s48
      %p59 = scmp.eq.s32.totalorder %s39, 0
      %p60 = por %p58, %p59
      %p61 = scmp.ne.s32.totalorder %s47, %s48
      %p62 = scmp.eq.s32.totalorder %s40, 1
      %p63 = por %p61, %p62
      %p65 = scmp.ne.s32.totalorder %s48, %s64
      %p66 = scmp.eq.s32.totalorder %s40, 0
      %p67 = por %p65, %p66
      %s68 = ssub.s32 %s34, %s41
      %p69 = scmp.eq.s32.totalorder %s68, 0
      %s71 = sadd.s32 %s70, 1
      %s72 = scalar_select %p69, %s70, %s71
      %p75 = pneg %p69
      %p76 = scmp.eq.s32.totalorder %s34, 1
      %p77 = por %p75, %p76
      %p78 = scmp.ne.s32.totalorder %s70, %s73
      %p79 = scmp.eq.s32.totalorder %s34, 0
      %p80 = por %p78, %p79
      %p81 = scmp.ne.s32.totalorder %s70, %s73
      %p82 = scmp.eq.s32.totalorder %s39, 1
      %p83 = por %p81, %p82
      %p84 = scmp.ne.s32.totalorder %s73, %s74
      %p85 = scmp.eq.s32.totalorder %s39, 0
      %p86 = por %p84, %p85
      %p87 = scmp.ne.s32.totalorder %s73, %s74
      %p88 = scmp.eq.s32.totalorder %s40, 1
      %p89 = por %p87, %p88
      %p91 = scmp.ne.s32.totalorder %s74, %s90
      %p92 = scmp.eq.s32.totalorder %s40, 0
      %p93 = por %p91, %p92
      %s94 = ssub.s32 %s34, %s41
      %p95 = scmp.eq.s32.totalorder %s94, 0
      %s97 = sadd.s32 %s96, 1
      %s98 = scalar_select %p95, %s96, %s97
      %p101 = pneg %p95
      %p102 = scmp.eq.s32.totalorder %s34, 1
      %p103 = por %p101, %p102
      %p104 = scmp.ne.s32.totalorder %s96, %s99
      %p105 = scmp.eq.s32.totalorder %s34, 0
      %p106 = por %p104, %p105
      %p107 = scmp.ne.s32.totalorder %s96, %s99
      %p108 = scmp.eq.s32.totalorder %s39, 1
      %p109 = por %p107, %p108
      %p110 = scmp.ne.s32.totalorder %s99, %s100
      %p111 = scmp.eq.s32.totalorder %s39, 0
      %p112 = por %p110, %p111
      %p113 = scmp.ne.s32.totalorder %s99, %s100
      %p114 = scmp.eq.s32.totalorder %s40, 1
      %p115 = por %p113, %p114
      %p117 = scmp.ne.s32.totalorder %s100, %s116
      %p118 = scmp.eq.s32.totalorder %s40, 0
      %p119 = por %p117, %p118
      %s121 = sadd.s32 %s120, 1
      %p124 = scmp.eq.s32.totalorder %s34, 1
      %p125 = scmp.ne.s32.totalorder %s120, %s122
      %p126 = scmp.eq.s32.totalorder %s34, 0
      %p127 = por %p125, %p126
      %p128 = scmp.ne.s32.totalorder %s120, %s122
      %p129 = scmp.eq.s32.totalorder %s39, 1
      %p130 = por %p128, %p129
      %p131 = scmp.ne.s32.totalorder %s122, %s123
      %p132 = scmp.eq.s32.totalorder %s39, 0
      %p133 = por %p131, %p132
      %p134 = scmp.ne.s32.totalorder %s122, %s123
      %p135 = scmp.eq.s32.totalorder %s40, 1
      %p136 = por %p134, %p135
      %p138 = scmp.ne.s32.totalorder %s123, %s137
      %p139 = scmp.eq.s32.totalorder %s40, 0
      %p140 = por %p138, %p139
      %s142 = sadd.s32 %s141, 1
      %p145 = scmp.eq.s32.totalorder %s34, 1
      %p146 = scmp.ne.s32.totalorder %s141, %s143
      %p147 = scmp.eq.s32.totalorder %s34, 0
      %p148 = por %p146, %p147
      %p149 = scmp.ne.s32.totalorder %s141, %s143
      %p150 = scmp.eq.s32.totalorder %s39, 1
      %p151 = por %p149, %p150
      %p152 = scmp.ne.s32.totalorder %s143, %s144
      %p153 = scmp.eq.s32.totalorder %s39, 0
      %p154 = por %p152, %p153
      %p155 = scmp.ne.s32.totalorder %s143, %s144
      %p156 = scmp.eq.s32.totalorder %s40, 1
      %p157 = por %p155, %p156
      %p159 = scmp.ne.s32.totalorder %s144, %s158
      %p160 = scmp.eq.s32.totalorder %s40, 0
      %p161 = por %p159, %p160
      %s163 = sadd.s32 %s162, 1
      %p166 = scmp.eq.s32.totalorder %s34, 1
      %p167 = scmp.ne.s32.totalorder %s162, %s164
      %p168 = scmp.eq.s32.totalorder %s34, 0
      %p169 = por %p167, %p168
      %p170 = scmp.ne.s32.totalorder %s162, %s164
      %p171 = scmp.eq.s32.totalorder %s39, 1
      %p172 = por %p170, %p171
      %p173 = scmp.ne.s32.totalorder %s164, %s165
      %p174 = scmp.eq.s32.totalorder %s39, 0
      %p175 = por %p173, %p174
      %p176 = scmp.ne.s32.totalorder %s164, %s165
      %p177 = scmp.eq.s32.totalorder %s40, 1
      %p178 = por %p176, %p177
      %p180 = scmp.ne.s32.totalorder %s165, %s179
      %p181 = scmp.eq.s32.totalorder %s40, 0
      %p182 = por %p180, %p181
      %s184 = sadd.s32 %s183, 1
      %p187 = scmp.eq.s32.totalorder %s34, 1
      %p188 = scmp.ne.s32.totalorder %s183, %s185
      %p189 = scmp.eq.s32.totalorder %s34, 0
      %p190 = por %p188, %p189
      %p191 = scmp.ne.s32.totalorder %s183, %s185
      %p192 = scmp.eq.s32.totalorder %s39, 1
      %p193 = por %p191, %p192
      %p194 = scmp.ne.s32.totalorder %s185, %s186
      %p195 = scmp.eq.s32.totalorder %s39, 0
      %p196 = por %p194, %p195
      %p197 = scmp.ne.s32.totalorder %s185, %s186
      %p198 = scmp.eq.s32.totalorder %s40, 1
      %p199 = por %p197, %p198
      %p201 = scmp.ne.s32.totalorder %s186, %s200
      %p202 = scmp.eq.s32.totalorder %s40, 0
      %p203 = por %p201, %p202
      %s205 = sadd.s32 %s204, 1
      %p208 = scmp.eq.s32.totalorder %s34, 1
      %p209 = scmp.ne.s32.totalorder %s204, %s206
      %p210 = scmp.eq.s32.totalorder %s34, 0
      %p211 = por %p209, %p210
      %p212 = scmp.ne.s32.totalorder %s204, %s206
      %p213 = scmp.eq.s32.totalorder %s39, 1
      %p214 = por %p212, %p213
      %p215 = scmp.ne.s32.totalorder %s206, %s207
      %p216 = scmp.eq.s32.totalorder %s39, 0
      %p217 = por %p215, %p216
      %p218 = scmp.ne.s32.totalorder %s206, %s207
      %p219 = scmp.eq.s32.totalorder %s40, 1
      %p220 = por %p218, %p219
      %p222 = scmp.ne.s32.totalorder %s207, %s221
      %p223 = scmp.eq.s32.totalorder %s40, 0
      %p224 = por %p222, %p223
      %s226 = sadd.s32 %s225, 1
      %p229 = scmp.eq.s32.totalorder %s34, 1
      %p230 = scmp.ne.s32.totalorder %s225, %s227
      %p231 = scmp.eq.s32.totalorder %s34, 0
      %p232 = por %p230, %p231
      %p233 = scmp.ne.s32.totalorder %s225, %s227
      %p234 = scmp.eq.s32.totalorder %s39, 1
      %p235 = por %p233, %p234
      %p236 = scmp.ne.s32.totalorder %s227, %s228
      %p237 = scmp.eq.s32.totalorder %s39, 0
      %p238 = por %p236, %p237
      %p239 = scmp.ne.s32.totalorder %s227, %s228
      %p240 = scmp.eq.s32.totalorder %s40, 1
      %p241 = por %p239, %p240
      %p243 = scmp.ne.s32.totalorder %s228, %s242
      %p244 = scmp.eq.s32.totalorder %s40, 0
      %p245 = por %p243, %p244
      %s247 = sadd.s32 %s246, 1
      %p250 = scmp.eq.s32.totalorder %s34, 1
      %p251 = scmp.ne.s32.totalorder %s246, %s248
      %p252 = scmp.eq.s32.totalorder %s34, 0
      %p253 = por %p251, %p252
      %p254 = scmp.ne.s32.totalorder %s246, %s248
      %p255 = scmp.eq.s32.totalorder %s39, 1
      %p256 = por %p254, %p255
      %p257 = scmp.ne.s32.totalorder %s248, %s249
      %p258 = scmp.eq.s32.totalorder %s39, 0
      %p259 = por %p257, %p258
      %p260 = scmp.ne.s32.totalorder %s248, %s249
      %p261 = scmp.eq.s32.totalorder %s40, 1
      %p262 = por %p260, %p261
      %p264 = scmp.ne.s32.totalorder %s249, %s263
      %p265 = scmp.eq.s32.totalorder %s40, 0
      %p266 = por %p264, %p265
      %s268 = sadd.s32 %s267, 1
      %p271 = scmp.eq.s32.totalorder %s34, 1
      %p272 = scmp.ne.s32.totalorder %s267, %s269
      %p273 = scmp.eq.s32.totalorder %s34, 0
      %p274 = por %p272, %p273
      %p275 = scmp.ne.s32.totalorder %s267, %s269
      %p276 = scmp.eq.s32.totalorder %s39, 1
      %p277 = por %p275, %p276
      %p278 = scmp.ne.s32.totalorder %s269, %s270
      %p279 = scmp.eq.s32.totalorder %s39, 0
      %p280 = por %p278, %p279
      %p281 = scmp.ne.s32.totalorder %s269, %s270
      %p282 = scmp.eq.s32.totalorder %s40, 1
      %p283 = por %p281, %p282
      %p285 = scmp.ne.s32.totalorder %s270, %s284
      %p286 = scmp.eq.s32.totalorder %s40, 0
      %p287 = por %p285, %p286
      %s289 = sadd.s32 %s288, 1
      %p292 = scmp.eq.s32.totalorder %s34, 1
      %p293 = scmp.ne.s32.totalorder %s288, %s290
      %p294 = scmp.eq.s32.totalorder %s34, 0
      %p295 = por %p293, %p294
      %p296 = scmp.ne.s32.totalorder %s288, %s290
      %p297 = scmp.eq.s32.totalorder %s39, 1
      %p298 = por %p296, %p297
      %p299 = scmp.ne.s32.totalorder %s290, %s291
      %p300 = scmp.eq.s32.totalorder %s39, 0
      %p301 = por %p299, %p300
      %p302 = scmp.ne.s32.totalorder %s290, %s291
      %p303 = scmp.eq.s32.totalorder %s40, 1
      %p304 = por %p302, %p303
      %p306 = scmp.ne.s32.totalorder %s291, %s305
      %p307 = scmp.eq.s32.totalorder %s40, 0
      %p308 = por %p306, %p307
      %s310 = sadd.s32 %s309, 1
      %p313 = scmp.eq.s32.totalorder %s34, 1
      %p314 = scmp.ne.s32.totalorder %s309, %s311
      %p315 = scmp.eq.s32.totalorder %s34, 0
      %p316 = por %p314, %p315
      %p317 = scmp.ne.s32.totalorder %s309, %s311
      %p318 = scmp.eq.s32.totalorder %s39, 1
      %p319 = por %p317, %p318
      %p320 = scmp.ne.s32.totalorder %s311, %s312
      %p321 = scmp.eq.s32.totalorder %s39, 0
      %p322 = por %p320, %p321
      %p323 = scmp.ne.s32.totalorder %s311, %s312
      %p324 = scmp.eq.s32.totalorder %s40, 1
      %p325 = por %p323, %p324
      %p327 = scmp.ne.s32.totalorder %s312, %s326
      %p328 = scmp.eq.s32.totalorder %s40, 0
      %p329 = por %p327, %p328
      %s331 = sadd.s32 %s330, 1
      %p334 = scmp.eq.s32.totalorder %s34, 1
      %p335 = scmp.ne.s32.totalorder %s330, %s332
      %p336 = scmp.eq.s32.totalorder %s34, 0
      %p337 = por %p335, %p336
      %p338 = scmp.ne.s32.totalorder %s330, %s332
      %p339 = scmp.eq.s32.totalorder %s39, 1
      %p340 = por %p338, %p339
      %p341 = scmp.ne.s32.totalorder %s332, %s333
      %p342 = scmp.eq.s32.totalorder %s39, 0
      %p343 = por %p341, %p342
      %p344 = scmp.ne.s32.totalorder %s332, %s333
      %p345 = scmp.eq.s32.totalorder %s40, 1
      %p346 = por %p344, %p345
      %p348 = scmp.ne.s32.totalorder %s333, %s347
      %p349 = scmp.eq.s32.totalorder %s40, 0
      %p350 = por %p348, %p349
      %s352 = sadd.s32 %s351, 1
      %p355 = scmp.eq.s32.totalorder %s34, 1
      %p356 = scmp.ne.s32.totalorder %s351, %s353
      %p357 = scmp.eq.s32.totalorder %s34, 0
      %p358 = por %p356, %p357
      %p359 = scmp.ne.s32.totalorder %s351, %s353
      %p360 = scmp.eq.s32.totalorder %s39, 1
      %p361 = por %p359, %p360
      %p362 = scmp.ne.s32.totalorder %s353, %s354
      %p363 = scmp.eq.s32.totalorder %s39, 0
      %p364 = por %p362, %p363
      %p365 = scmp.ne.s32.totalorder %s353, %s354
      %p366 = scmp.eq.s32.totalorder %s40, 1
      %p367 = por %p365, %p366
      %p369 = scmp.ne.s32.totalorder %s354, %s368
      %p370 = scmp.eq.s32.totalorder %s40, 0
      %p371 = por %p369, %p370
      %s373 = sadd.s32 %s372, 1
      %p376 = scmp.eq.s32.totalorder %s34, 1
      %p377 = scmp.ne.s32.totalorder %s372, %s374
      %p378 = scmp.eq.s32.totalorder %s34, 0
      %p379 = por %p377, %p378
      %p380 = scmp.ne.s32.totalorder %s372, %s374
      %p381 = scmp.eq.s32.totalorder %s39, 1
      %p382 = por %p380, %p381
      %p383 = scmp.ne.s32.totalorder %s374, %s375
      %p384 = scmp.eq.s32.totalorder %s39, 0
      %p385 = por %p383, %p384
      %p386 = scmp.ne.s32.totalorder %s374, %s375
      %p387 = scmp.eq.s32.totalorder %s40, 1
      %p388 = por %p386, %p387
      %p390 = scmp.ne.s32.totalorder %s375, %s389
      %p391 = scmp.eq.s32.totalorder %s40, 0
      %p392 = por %p390, %p391
      %s394 = sadd.s32 %s393, 1
      %p397 = scmp.eq.s32.totalorder %s34, 1
      %p398 = scmp.ne.s32.totalorder %s393, %s395
      %p399 = scmp.eq.s32.totalorder %s34, 0
      %p400 = por %p398, %p399
      %p401 = scmp.ne.s32.totalorder %s393, %s395
      %p402 = scmp.eq.s32.totalorder %s39, 1
      %p403 = por %p401, %p402
      %p404 = scmp.ne.s32.totalorder %s395, %s396
      %p405 = scmp.eq.s32.totalorder %s39, 0
      %p406 = por %p404, %p405
      %p407 = scmp.ne.s32.totalorder %s395, %s396
      %p408 = scmp.eq.s32.totalorder %s40, 1
      %p409 = por %p407, %p408
      %p411 = scmp.ne.s32.totalorder %s396, %s410
      %p412 = scmp.eq.s32.totalorder %s40, 0
      %p413 = por %p411, %p412
      %s415 = sadd.s32 %s414, 1
      %p418 = scmp.eq.s32.totalorder %s34, 1
      %p419 = scmp.ne.s32.totalorder %s414, %s416
      %p420 = scmp.eq.s32.totalorder %s34, 0
      %p421 = por %p419, %p420
      %p422 = scmp.ne.s32.totalorder %s414, %s416
      %p423 = scmp.eq.s32.totalorder %s39, 1
      %p424 = por %p422, %p423
      %p425 = scmp.ne.s32.totalorder %s416, %s417
      %p426 = scmp.eq.s32.totalorder %s39, 0
      %p427 = por %p425, %p426
      %p428 = scmp.ne.s32.totalorder %s416, %s417
      %p429 = scmp.eq.s32.totalorder %s40, 1
      %p430 = por %p428, %p429
      %p432 = scmp.ne.s32.totalorder %s417, %s431
      %p433 = scmp.eq.s32.totalorder %s40, 0
      %p434 = por %p432, %p433
      %s435 = ssub.s32 %s34, %s41
      %p436 = scmp.eq.s32.totalorder %s435, 0
      %s438 = sadd.s32 %s437, 1
      %s439 = scalar_select %p436, %s437, %s438
      %p442 = pneg %p436
      %p443 = scmp.eq.s32.totalorder %s34, 1
      %p444 = por %p442, %p443
      %p445 = scmp.ne.s32.totalorder %s437, %s440
      %p446 = scmp.eq.s32.totalorder %s34, 0
      %p447 = por %p445, %p446
      %p448 = scmp.ne.s32.totalorder %s437, %s440
      %p449 = scmp.eq.s32.totalorder %s39, 1
      %p450 = por %p448, %p449
      %p451 = scmp.ne.s32.totalorder %s440, %s441
      %p452 = scmp.eq.s32.totalorder %s39, 0
      %p453 = por %p451, %p452
      %p454 = scmp.ne.s32.totalorder %s440, %s441
      %p455 = scmp.eq.s32.totalorder %s40, 1
      %p456 = por %p454, %p455
      %p458 = scmp.ne.s32.totalorder %s441, %s457
      %p459 = scmp.eq.s32.totalorder %s40, 0
      %p460 = por %p458, %p459
      %p461 = scmp.le.s32.totalorder 1, %s34
      %p462 = scmp.lt.s32.totalorder %s34, 3
      %p463 = pnand %p461, %p462
      %p464 = pneg %p463
      // Predicated region
      $region9: #{tpu_custom_call.1} parent=5 // pred_check
        _
      $region10: #{tpu_custom_call.1} parent=5 // pred_check_branch
        %466 = sbr.rel (%p463) target = $region12
      $region11: #{tpu_custom_call.1} parent=5 // pred_region
        %s467 = ssub.s32 %s34, 1
        // Predicated region
        $region13: #{tpu_custom_call.1} parent=11 // pred_check
          %p468 = pneg %p133
        $region14: #{tpu_custom_call.1} parent=11 // pred_check_branch
          %470 = sbr.rel (%p468) target = $region16
        $region15: #{tpu_custom_call.1} parent=11 // pred_region
          _
        $region16: #{tpu_custom_call.1} parent=11 // pred_fallthru
          _
        // Predicated region
        $region17: #{tpu_custom_call.1} parent=11 // pred_check
          %p471 = pneg %p154
        $region18: #{tpu_custom_call.1} parent=11 // pred_check_branch
          %473 = sbr.rel (%p471) target = $region20
        $region19: #{tpu_custom_call.1} parent=11 // pred_region
          _
        $region20: #{tpu_custom_call.1} parent=11 // pred_fallthru
          _
        // Predicated region
        $region21: #{tpu_custom_call.1} parent=11 // pred_check
          %p474 = pneg %p175
        $region22: #{tpu_custom_call.1} parent=11 // pred_check_branch
          %476 = sbr.rel (%p474) target = $region24
        $region23: #{tpu_custom_call.1} parent=11 // pred_region
          _
        $region24: #{tpu_custom_call.1} parent=11 // pred_fallthru
          _
        // Predicated region
        $region25: #{tpu_custom_call.1} parent=11 // pred_check
          %p477 = pneg %p196
        $region26: #{tpu_custom_call.1} parent=11 // pred_check_branch
          %479 = sbr.rel (%p477) target = $region28
        $region27: #{tpu_custom_call.1} parent=11 // pred_region
          _
        $region28: #{tpu_custom_call.1} parent=11 // pred_fallthru
          _
        // Predicated region
        $region29: #{tpu_custom_call.1} parent=11 // pred_check
          %p480 = pneg %p217
        $region30: #{tpu_custom_call.1} parent=11 // pred_check_branch
          %482 = sbr.rel (%p480) target = $region32
        $region31: #{tpu_custom_call.1} parent=11 // pred_region
          _
        $region32: #{tpu_custom_call.1} parent=11 // pred_fallthru
          _
        // Predicated region
        $region33: #{tpu_custom_call.1} parent=11 // pred_check
          %p483 = pneg %p238
        $region34: #{tpu_custom_call.1} parent=11 // pred_check_branch
          %485 = sbr.rel (%p483) target = $region36
        $region35: #{tpu_custom_call.1} parent=11 // pred_region
          _
        $region36: #{tpu_custom_call.1} parent=11 // pred_fallthru
          _
        // Predicated region
        $region37: #{tpu_custom_call.1} parent=11 // pred_check
          %p486 = pneg %p259
        $region38: #{tpu_custom_call.1} parent=11 // pred_check_branch
          %488 = sbr.rel (%p486) target = $region40
        $region39: #{tpu_custom_call.1} parent=11 // pred_region
          _
        $region40: #{tpu_custom_call.1} parent=11 // pred_fallthru
          _
        // Predicated region
        $region41: #{tpu_custom_call.1} parent=11 // pred_check
          %p489 = pneg %p280
        $region42: #{tpu_custom_call.1} parent=11 // pred_check_branch
          %491 = sbr.rel (%p489) target = $region44
        $region43: #{tpu_custom_call.1} parent=11 // pred_region
          _
        $region44: #{tpu_custom_call.1} parent=11 // pred_fallthru
          _
        // Predicated region
        $region45: #{tpu_custom_call.1} parent=11 // pred_check
          %p492 = pneg %p301
        $region46: #{tpu_custom_call.1} parent=11 // pred_check_branch
          %494 = sbr.rel (%p492) target = $region48
        $region47: #{tpu_custom_call.1} parent=11 // pred_region
          %s496 = ssub.s32 1024, 1024
          %497 = vsyncadd [#allocation7], %s496
          %s498 = sshll.u32 [#allocation6], 4
          %s499 = int_to_ptr.vmem [resolvable:$true] %s498
          %504 = dma.hbm_to_vmem [thread:$0]  %s11, 1024, %s499, [#allocation7], 64, 64, 4
        $region48: #{tpu_custom_call.1} parent=11 // pred_fallthru
          _
        // Predicated region
        $region49: #{tpu_custom_call.1} parent=11 // pred_check
          %p505 = pneg %p322
        $region50: #{tpu_custom_call.1} parent=11 // pred_check_branch
          %507 = sbr.rel (%p505) target = $region52
        $region51: #{tpu_custom_call.1} parent=11 // pred_region
          _
        $region52: #{tpu_custom_call.1} parent=11 // pred_fallthru
          _
        // Predicated region
        $region53: #{tpu_custom_call.1} parent=11 // pred_check
          %p508 = pneg %p343
        $region54: #{tpu_custom_call.1} parent=11 // pred_check_branch
          %510 = sbr.rel (%p508) target = $region56
        $region55: #{tpu_custom_call.1} parent=11 // pred_region
          %s512 = ssub.s32 1024, 1024
          %513 = vsyncadd [#allocation7], %s512
          %s514 = sshll.u32 [#allocation8], 4
          %s515 = int_to_ptr.vmem [resolvable:$true] %s514
          %520 = dma.hbm_to_vmem [thread:$0]  %s13, 1024, %s515, [#allocation7], 64, 64, 4
        $region56: #{tpu_custom_call.1} parent=11 // pred_fallthru
          _
        // Predicated region
        $region57: #{tpu_custom_call.1} parent=11 // pred_check
          %p521 = pneg %p364
        $region58: #{tpu_custom_call.1} parent=11 // pred_check_branch
          %523 = sbr.rel (%p521) target = $region60
        $region59: #{tpu_custom_call.1} parent=11 // pred_region
          _
        $region60: #{tpu_custom_call.1} parent=11 // pred_fallthru
          _
        // Predicated region
        $region61: #{tpu_custom_call.1} parent=11 // pred_check
          %p524 = pneg %p385
        $region62: #{tpu_custom_call.1} parent=11 // pred_check_branch
          %526 = sbr.rel (%p524) target = $region64
        $region63: #{tpu_custom_call.1} parent=11 // pred_region
          %s528 = ssub.s32 1024, 1024
          %529 = vsyncadd [#allocation10], %s528
          %s530 = sshll.u32 [#allocation9], 4
          %s531 = int_to_ptr.vmem [resolvable:$true] %s530
          %536 = dma.hbm_to_vmem [thread:$0]  %s15, 1024, %s531, [#allocation10], 64, 64, 4
        $region64: #{tpu_custom_call.1} parent=11 // pred_fallthru
          _
        // Predicated region
        $region65: #{tpu_custom_call.1} parent=11 // pred_check
          %p537 = pneg %p406
        $region66: #{tpu_custom_call.1} parent=11 // pred_check_branch
          %539 = sbr.rel (%p537) target = $region68
        $region67: #{tpu_custom_call.1} parent=11 // pred_region
          _
        $region68: #{tpu_custom_call.1} parent=11 // pred_fallthru
          _
      $region12: #{tpu_custom_call.1} parent=5 // pred_fallthru
        _
      %p540 = scmp.lt.s32.totalorder %s34, 2
      // Predicated region
      $region69: #{tpu_custom_call.1} parent=5 // pred_check
        %p541 = pneg %p540
      $region70: #{tpu_custom_call.1} parent=5 // pred_check_branch
        %543 = sbr.rel (%p541) target = $region72
      $region71: #{tpu_custom_call.1} parent=5 // pred_region
        // Predicated region
        $region73: #{tpu_custom_call.1} parent=71 // pred_check
          %p544 = pneg %p54
        $region74: #{tpu_custom_call.1} parent=71 // pred_check_branch
          %546 = sbr.rel (%p544) target = $region76
        $region75: #{tpu_custom_call.1} parent=71 // pred_region
          %s547 = smul.u32 16, %s34
          %p548 = scmp.lt.s32.totalorder %s547, 31
          %s549 = scalar_select %p548, %s547, 31
          %s550 = smul.addr %s549, 8
          %s551 = scalar_lea.vmem %s0, %s550
          %s552 = smul.u32 16, %s34
        $region76: #{tpu_custom_call.1} parent=71 // pred_fallthru
          _
        // Predicated region
        $region77: #{tpu_custom_call.1} parent=71 // pred_check
          %p553 = pneg %p80
        $region78: #{tpu_custom_call.1} parent=71 // pred_check_branch
          %555 = sbr.rel (%p553) target = $region80
        $region79: #{tpu_custom_call.1} parent=71 // pred_region
          %p556 = scmp.lt.s32.totalorder %s34, 1
          %s557 = scalar_select %p556, %s34, 1
          %s558 = smul.addr %s557, 2
          %s559 = scalar_lea.vmem %s1, %s558
        $region80: #{tpu_custom_call.1} parent=71 // pred_fallthru
          _
        // Predicated region
        $region81: #{tpu_custom_call.1} parent=71 // pred_check
          %p560 = pneg %p106
        $region82: #{tpu_custom_call.1} parent=71 // pred_check_branch
          %562 = sbr.rel (%p560) target = $region84
        $region83: #{tpu_custom_call.1} parent=71 // pred_region
          %s563 = sand.u32 %s96, 1
          %s564 = scalar_lea.sflag [#allocation4], %s563
          %s565 = sand.u32 %s96, 1
          %s566 = smul.addr %s565, 64
          %s567 = scalar_lea.vmem [#allocation3], %s566
          %s568 = smul.u32 16, %s34
          %s570 = ssub.s32 1024, 1024
          %571 = vsyncadd %s564, %s570
          %s572 = smul.addr %s568, 64
          %s573 = scalar_lea.hbm %s2, %s572
          %s574 = sshll.u32 %s567, 4
          %s575 = int_to_ptr.vmem [resolvable:$true] %s574
          %580 = dma.hbm_to_vmem [thread:$0]  %s573, 1024, %s575, %s564, 64, 64, 4
        $region84: #{tpu_custom_call.1} parent=71 // pred_fallthru
          _
      $region72: #{tpu_custom_call.1} parent=5 // pred_fallthru
        _
      %p581 = scmp.le.s32.totalorder 1, %s34
      %p582 = scmp.lt.s32.totalorder %s34, 3
      %p583 = pnand %p581, %p582
      %p584 = pneg %p583
      // Predicated region
      $region85: #{tpu_custom_call.1} parent=5 // pred_check
        _
      $region86: #{tpu_custom_call.1} parent=5 // pred_check_branch
        %586 = sbr.rel (%p583) target = $region88
      $region87: #{tpu_custom_call.1} parent=5 // pred_region
        %s587 = ssub.s32 %s34, 1
        %s588 = sand.u32 %s99, 1
        %s589 = scalar_lea.sflag [#allocation4], %s588
        %s590 = sand.u32 %s99, 1
        %s591 = smul.addr %s590, 64
        %s592 = scalar_lea.vmem [#allocation3], %s591
        // Predicated region
        $region89: #{tpu_custom_call.1} parent=87 // pred_check
          %p593 = pneg %p112
        $region90: #{tpu_custom_call.1} parent=87 // pred_check_branch
          %595 = sbr.rel (%p593) target = $region92
        $region91: #{tpu_custom_call.1} parent=87 // pred_region
          %596 = dma.done %s589, 1024
        $region92: #{tpu_custom_call.1} parent=87 // pred_fallthru
          _
        // Predicated region
        $region93: #{tpu_custom_call.1} parent=87 // pred_check
          %p597 = pneg %p301
        $region94: #{tpu_custom_call.1} parent=87 // pred_check_branch
          %599 = sbr.rel (%p597) target = $region96
        $region95: #{tpu_custom_call.1} parent=87 // pred_region
          %600 = dma.done [#allocation7], 1024
        $region96: #{tpu_custom_call.1} parent=87 // pred_fallthru
          _
        // Predicated region
        $region97: #{tpu_custom_call.1} parent=87 // pred_check
          %p601 = pneg %p343
        $region98: #{tpu_custom_call.1} parent=87 // pred_check_branch
          %603 = sbr.rel (%p601) target = $region100
        $region99: #{tpu_custom_call.1} parent=87 // pred_region
          %604 = dma.done [#allocation7], 1024
        $region100: #{tpu_custom_call.1} parent=87 // pred_fallthru
          _
        // Predicated region
        $region101: #{tpu_custom_call.1} parent=87 // pred_check
          %p605 = pneg %p385
        $region102: #{tpu_custom_call.1} parent=87 // pred_check_branch
          %607 = sbr.rel (%p605) target = $region104
        $region103: #{tpu_custom_call.1} parent=87 // pred_region
          %608 = dma.done [#allocation10], 1024
        $region104: #{tpu_custom_call.1} parent=87 // pred_fallthru
          _
        %s609 = smul.u32 16, %s39
        %p610 = scmp.lt.s32.totalorder %s609, 31
        %s611 = scalar_select %p610, %s609, 31
        %s612 = smul.addr %s611, 8
        %s613 = scalar_lea.vmem %s0, %s612
        %p614 = pneg %p60
        %p615 = pneg %p57
        %p616 = scmp.lt.s32.totalorder %s39, 1
        %s617 = scalar_select %p616, %s39, 1
        %s618 = smul.addr %s617, 2
        %s619 = scalar_lea.vmem %s1, %s618
        %p620 = pneg %p86
        %p621 = pneg %p83
        %s622 = sand.u32 %s99, 1
        %s623 = scalar_lea.sflag [#allocation4], %s622
        %s624 = sand.u32 %s99, 1
        %s625 = smul.addr %s624, 64
        %s626 = scalar_lea.vmem [#allocation3], %s625
        %p627 = pneg %p112
        %p628 = pneg %p109
        %p629 = pneg %p133
        %p630 = pneg %p130
        %p631 = pneg %p154
        %p632 = pneg %p151
        %p633 = pneg %p175
        %p634 = pneg %p172
        %p635 = pneg %p196
        %p636 = pneg %p193
        %p637 = pneg %p217
        %p638 = pneg %p214
        %p639 = pneg %p238
        %p640 = pneg %p235
        %p641 = pneg %p259
        %p642 = pneg %p256
        %p643 = pneg %p280
        %p644 = pneg %p277
        %p645 = pneg %p301
        %p646 = pneg %p298
        %p647 = pneg %p322
        %p648 = pneg %p319
        %p649 = pneg %p343
        %p650 = pneg %p340
        %p651 = pneg %p364
        %p652 = pneg %p361
        %p653 = pneg %p385
        %p654 = pneg %p382
        %p655 = pneg %p406
        %p656 = pneg %p403
        %p657 = pneg %p427
        %p658 = pneg %p424
        %p659 = pneg %p453
        %p660 = pneg %p450
        %s661 = sand.u32 %s440, 1
        %s662 = scalar_lea.sflag [#allocation13], %s661
        %s663 = sand.u32 %s440, 1
        %s664 = smul.addr %s663, 128
        %s665 = scalar_lea.vmem [#allocation12], %s664
        %s666 = smul.u32 16, %s39
        %p667 = scmp.lt.s32.totalorder %s666, 31
        %s668 = scalar_select %p667, %s666, 31
        %s669 = smul.addr %s668, 8
        %s670 = scalar_lea.vmem %s0, %s669
        %s671 = smul.u32 16, %s39
        %p672 = scmp.lt.s32.totalorder %s39, 1
        %s673 = scalar_select %p672, %s39, 1
        %s674 = smul.addr %s673, 2
        %s675 = scalar_lea.vmem %s1, %s674
        %s676 = smul.u32 16, %s39
        %s677 = smul.u32 16, %s39
        %p679 = scmp.eq.s32.totalorder %s39, 0
        // Predicated region
        $region105: #{tpu_custom_call.1} parent=87 // pred_check
          %p680 = pneg %p679
        $region106: #{tpu_custom_call.1} parent=87 // pred_check_branch
          %682 = sbr.rel (%p680) target = $region108
        $region107: #{tpu_custom_call.1} parent=87 // pred_region
          %683 = vst [vmem:[#allocation2] sm:$0xff] 0.0
        $region108: #{tpu_custom_call.1} parent=87 // pred_fallthru
          _
        %v684 = vld [vmem:[%s670] sm:$0xff]
        %v685 = vld [vmem:[%s670 + $0x8] sm:$0xff]
        %v686 = vld [vmem:[%s670 + $0x10] sm:$0xff]
        %v687 = vld [vmem:[%s670 + $0x18] sm:$0xff]
        %v688 = vld [vmem:[%s670 + $0x20] sm:$0xff]
        %v689 = vld [vmem:[%s670 + $0x28] sm:$0xff]
        %v690 = vld [vmem:[%s670 + $0x30] sm:$0xff]
        %v691 = vld [vmem:[%s670 + $0x38] sm:$0xff]
        %v692 = vld [vmem:[%s670 + $0x40] sm:$0xff]
        %v693 = vld [vmem:[%s670 + $0x48] sm:$0xff]
        %v694 = vld [vmem:[%s670 + $0x50] sm:$0xff]
        %v695 = vld [vmem:[%s670 + $0x58] sm:$0xff]
        %v696 = vld [vmem:[%s670 + $0x60] sm:$0xff]
        %v697 = vld [vmem:[%s670 + $0x68] sm:$0xff]
        %v698 = vld [vmem:[%s670 + $0x70] sm:$0xff]
        %v699 = vld [vmem:[%s670 + $0x78] sm:$0xff]
        %v700 = vlaneseq
        %v701 = vand.u32 %v700, 127
        %702 = vset.pattern.permute.xlu0 0
        %703 = vperm.xlu0 %702, %v684
        %v704 = vpop.permute.xlu0 %703
        %705 = vset.pattern.permute.xlu0 0
        %706 = vperm.xlu0 %705, %v685
        %v707 = vpop.permute.xlu0 %706
        %708 = vset.pattern.permute.xlu0 0
        %709 = vperm.xlu0 %708, %v686
        %v710 = vpop.permute.xlu0 %709
        %711 = vset.pattern.permute.xlu0 0
        %712 = vperm.xlu0 %711, %v687
        %v713 = vpop.permute.xlu0 %712
        %714 = vset.pattern.permute.xlu0 0
        %715 = vperm.xlu0 %714, %v688
        %v716 = vpop.permute.xlu0 %715
        %717 = vset.pattern.permute.xlu0 0
        %718 = vperm.xlu0 %717, %v689
        %v719 = vpop.permute.xlu0 %718
        %720 = vset.pattern.permute.xlu0 0
        %721 = vperm.xlu0 %720, %v690
        %v722 = vpop.permute.xlu0 %721
        %723 = vset.pattern.permute.xlu0 0
        %724 = vperm.xlu0 %723, %v691
        %v725 = vpop.permute.xlu0 %724
        %726 = vset.pattern.permute.xlu0 0
        %727 = vperm.xlu0 %726, %v692
        %v728 = vpop.permute.xlu0 %727
        %729 = vset.pattern.permute.xlu0 0
        %730 = vperm.xlu0 %729, %v693
        %v731 = vpop.permute.xlu0 %730
        %732 = vset.pattern.permute.xlu0 0
        %733 = vperm.xlu0 %732, %v694
        %v734 = vpop.permute.xlu0 %733
        %735 = vset.pattern.permute.xlu0 0
        %736 = vperm.xlu0 %735, %v695
        %v737 = vpop.permute.xlu0 %736
        %738 = vset.pattern.permute.xlu0 0
        %739 = vperm.xlu0 %738, %v696
        %v740 = vpop.permute.xlu0 %739
        %741 = vset.pattern.permute.xlu0 0
        %742 = vperm.xlu0 %741, %v697
        %v743 = vpop.permute.xlu0 %742
        %744 = vset.pattern.permute.xlu0 0
        %745 = vperm.xlu0 %744, %v698
        %v746 = vpop.permute.xlu0 %745
        %747 = vset.pattern.permute.xlu0 0
        %748 = vperm.xlu0 %747, %v699
        %v749 = vpop.permute.xlu0 %748
        %vm750 = vcmp.eq.s32.totalorder %v701, %v704
        %vm751 = vcmp.eq.s32.totalorder %v701, %v707
        %vm752 = vcmp.eq.s32.totalorder %v701, %v710
        %vm753 = vcmp.eq.s32.totalorder %v701, %v713
        %vm754 = vcmp.eq.s32.totalorder %v701, %v716
        %vm755 = vcmp.eq.s32.totalorder %v701, %v719
        %vm756 = vcmp.eq.s32.totalorder %v701, %v722
        %vm757 = vcmp.eq.s32.totalorder %v701, %v725
        %vm758 = vcmp.eq.s32.totalorder %v701, %v728
        %vm759 = vcmp.eq.s32.totalorder %v701, %v731
        %vm760 = vcmp.eq.s32.totalorder %v701, %v734
        %vm761 = vcmp.eq.s32.totalorder %v701, %v737
        %vm762 = vcmp.eq.s32.totalorder %v701, %v740
        %vm763 = vcmp.eq.s32.totalorder %v701, %v743
        %vm764 = vcmp.eq.s32.totalorder %v701, %v746
        %vm765 = vcmp.eq.s32.totalorder %v701, %v749
        %v766 = vsel %vm750, 1, 0
        %v767 = vsel %vm751, 1, 0
        %v768 = vsel %vm752, 1, 0
        %v769 = vsel %vm753, 1, 0
        %v770 = vsel %vm754, 1, 0
        %v771 = vsel %vm755, 1, 0
        %v772 = vsel %vm756, 1, 0
        %v773 = vsel %vm757, 1, 0
        %v774 = vsel %vm758, 1, 0
        %v775 = vsel %vm759, 1, 0
        %v776 = vsel %vm760, 1, 0
        %v777 = vsel %vm761, 1, 0
        %v778 = vsel %vm762, 1, 0
        %v779 = vsel %vm763, 1, 0
        %v780 = vsel %vm764, 1, 0
        %v781 = vsel %vm765, 1, 0
        %v782 = vcvt.s32.f32 %v766
        %v783 = vcvt.s32.f32 %v767
        %v784 = vcvt.s32.f32 %v768
        %v785 = vcvt.s32.f32 %v769
        %v786 = vcvt.s32.f32 %v770
        %v787 = vcvt.s32.f32 %v771
        %v788 = vcvt.s32.f32 %v772
        %v789 = vcvt.s32.f32 %v773
        %v790 = vcvt.s32.f32 %v774
        %v791 = vcvt.s32.f32 %v775
        %v792 = vcvt.s32.f32 %v776
        %v793 = vcvt.s32.f32 %v777
        %v794 = vcvt.s32.f32 %v778
        %v795 = vcvt.s32.f32 %v779
        %v796 = vcvt.s32.f32 %v780
        %v797 = vcvt.s32.f32 %v781
        %v798 = vpack.c.bf16 %v783, %v782
        %v799 = vpack.c.bf16 %v785, %v784
        %v800 = vpack.c.bf16 %v787, %v786
        %v801 = vpack.c.bf16 %v789, %v788
        %v802 = vpack.c.bf16 %v791, %v790
        %v803 = vpack.c.bf16 %v793, %v792
        %v804 = vpack.c.bf16 %v795, %v794
        %v805 = vpack.c.bf16 %v797, %v796
        %806 = vset.pattern.permute.xlu0 1
        %807 = vperm.xlu0 %806, %v684
        %v808 = vpop.permute.xlu0 %807
        %809 = vset.pattern.permute.xlu0 1
        %810 = vperm.xlu0 %809, %v685
        %v811 = vpop.permute.xlu0 %810
        %812 = vset.pattern.permute.xlu0 1
        %813 = vperm.xlu0 %812, %v686
        %v814 = vpop.permute.xlu0 %813
        %815 = vset.pattern.permute.xlu0 1
        %816 = vperm.xlu0 %815, %v687
        %v817 = vpop.permute.xlu0 %816
        %818 = vset.pattern.permute.xlu0 1
        %819 = vperm.xlu0 %818, %v688
        %v820 = vpop.permute.xlu0 %819
        %821 = vset.pattern.permute.xlu0 1
        %822 = vperm.xlu0 %821, %v689
        %v823 = vpop.permute.xlu0 %822
        %824 = vset.pattern.permute.xlu0 1
        %825 = vperm.xlu0 %824, %v690
        %v826 = vpop.permute.xlu0 %825
        %827 = vset.pattern.permute.xlu0 1
        %828 = vperm.xlu0 %827, %v691
        %v829 = vpop.permute.xlu0 %828
        %830 = vset.pattern.permute.xlu0 1
        %831 = vperm.xlu0 %830, %v692
        %v832 = vpop.permute.xlu0 %831
        %833 = vset.pattern.permute.xlu0 1
        %834 = vperm.xlu0 %833, %v693
        %v835 = vpop.permute.xlu0 %834
        %836 = vset.pattern.permute.xlu0 1
        %837 = vperm.xlu0 %836, %v694
        %v838 = vpop.permute.xlu0 %837
        %839 = vset.pattern.permute.xlu0 1
        %840 = vperm.xlu0 %839, %v695
        %v841 = vpop.permute.xlu0 %840
        %842 = vset.pattern.permute.xlu0 1
        %843 = vperm.xlu0 %842, %v696
        %v844 = vpop.permute.xlu0 %843
        %845 = vset.pattern.permute.xlu0 1
        %846 = vperm.xlu0 %845, %v697
        %v847 = vpop.permute.xlu0 %846
        %848 = vset.pattern.permute.xlu0 1
        %849 = vperm.xlu0 %848, %v698
        %v850 = vpop.permute.xlu0 %849
        %851 = vset.pattern.permute.xlu0 1
        %852 = vperm.xlu0 %851, %v699
        %v853 = vpop.permute.xlu0 %852
        %vm854 = vcmp.eq.s32.totalorder %v701, %v808
        %vm855 = vcmp.eq.s32.totalorder %v701, %v811
        %vm856 = vcmp.eq.s32.totalorder %v701, %v814
        %vm857 = vcmp.eq.s32.totalorder %v701, %v817
        %vm858 = vcmp.eq.s32.totalorder %v701, %v820
        %vm859 = vcmp.eq.s32.totalorder %v701, %v823
        %vm860 = vcmp.eq.s32.totalorder %v701, %v826
        %vm861 = vcmp.eq.s32.totalorder %v701, %v829
        %vm862 = vcmp.eq.s32.totalorder %v701, %v832
        %vm863 = vcmp.eq.s32.totalorder %v701, %v835
        %vm864 = vcmp.eq.s32.totalorder %v701, %v838
        %vm865 = vcmp.eq.s32.totalorder %v701, %v841
        %vm866 = vcmp.eq.s32.totalorder %v701, %v844
        %vm867 = vcmp.eq.s32.totalorder %v701, %v847
        %vm868 = vcmp.eq.s32.totalorder %v701, %v850
        %vm869 = vcmp.eq.s32.totalorder %v701, %v853
        %v870 = vsel %vm854, 1, 0
        %v871 = vsel %vm855, 1, 0
        %v872 = vsel %vm856, 1, 0
        %v873 = vsel %vm857, 1, 0
        %v874 = vsel %vm858, 1, 0
        %v875 = vsel %vm859, 1, 0
        %v876 = vsel %vm860, 1, 0
        %v877 = vsel %vm861, 1, 0
        %v878 = vsel %vm862, 1, 0
        %v879 = vsel %vm863, 1, 0
        %v880 = vsel %vm864, 1, 0
        %v881 = vsel %vm865, 1, 0
        %v882 = vsel %vm866, 1, 0
        %v883 = vsel %vm867, 1, 0
        %v884 = vsel %vm868, 1, 0
        %v885 = vsel %vm869, 1, 0
        %v886 = vcvt.s32.f32 %v870
        %v887 = vcvt.s32.f32 %v871
        %v888 = vcvt.s32.f32 %v872
        %v889 = vcvt.s32.f32 %v873
        %v890 = vcvt.s32.f32 %v874
        %v891 = vcvt.s32.f32 %v875
        %v892 = vcvt.s32.f32 %v876
        %v893 = vcvt.s32.f32 %v877
        %v894 = vcvt.s32.f32 %v878
        %v895 = vcvt.s32.f32 %v879
        %v896 = vcvt.s32.f32 %v880
        %v897 = vcvt.s32.f32 %v881
        %v898 = vcvt.s32.f32 %v882
        %v899 = vcvt.s32.f32 %v883
        %v900 = vcvt.s32.f32 %v884
        %v901 = vcvt.s32.f32 %v885
        %v902 = vpack.c.bf16 %v887, %v886
        %v903 = vpack.c.bf16 %v889, %v888
        %v904 = vpack.c.bf16 %v891, %v890
        %v905 = vpack.c.bf16 %v893, %v892
        %v906 = vpack.c.bf16 %v895, %v894
        %v907 = vpack.c.bf16 %v897, %v896
        %v908 = vpack.c.bf16 %v899, %v898
        %v909 = vpack.c.bf16 %v901, %v900
        %v910 = vld [vmem:[%s5] sm:$0xf]
        %v911 = vld [vmem:[%s592] sm:$0xf]
        %v912 = vld [vmem:[%s592 + $0x4] sm:$0xf]
        %v913 = vld [vmem:[%s592 + $0x8] sm:$0xf]
        %v914 = vld [vmem:[%s592 + $0xc] sm:$0xf]
        %v915 = vld [vmem:[%s592 + $0x10] sm:$0xf]
        %v916 = vld [vmem:[%s592 + $0x14] sm:$0xf]
        %v917 = vld [vmem:[%s592 + $0x18] sm:$0xf]
        %v918 = vld [vmem:[%s592 + $0x1c] sm:$0xf]
        %v919 = vld [vmem:[%s592 + $0x20] sm:$0xf]
        %v920 = vld [vmem:[%s592 + $0x24] sm:$0xf]
        %v921 = vld [vmem:[%s592 + $0x28] sm:$0xf]
        %v922 = vld [vmem:[%s592 + $0x2c] sm:$0xf]
        %v923 = vld [vmem:[%s592 + $0x30] sm:$0xf]
        %v924 = vld [vmem:[%s592 + $0x34] sm:$0xf]
        %v925 = vld [vmem:[%s592 + $0x38] sm:$0xf]
        %v926 = vld [vmem:[%s592 + $0x3c] sm:$0xf]
        %v927 = vld [vmem:[%s7] sm:$0xf]
        %v928 = vld [vmem:[%s7 + $0x4] sm:$0xf]
        %v929 = vld [vmem:[%s7 + $0x8] sm:$0xf]
        %v930 = vld [vmem:[%s7 + $0xc] sm:$0xf]
        %v931 = vld [vmem:[%s7 + $0x10] sm:$0xf]
        %v932 = vld [vmem:[%s7 + $0x14] sm:$0xf]
        %v933 = vld [vmem:[%s7 + $0x18] sm:$0xf]
        %v934 = vld [vmem:[%s7 + $0x1c] sm:$0xf]
        %v935 = vld [vmem:[%s7 + $0x20] sm:$0xf]
        %v936 = vld [vmem:[%s7 + $0x24] sm:$0xf]
        %v937 = vld [vmem:[%s7 + $0x28] sm:$0xf]
        %v938 = vld [vmem:[%s7 + $0x2c] sm:$0xf]
        %v939 = vld [vmem:[%s7 + $0x30] sm:$0xf]
        %v940 = vld [vmem:[%s7 + $0x34] sm:$0xf]
        %v941 = vld [vmem:[%s7 + $0x38] sm:$0xf]
        %v942 = vld [vmem:[%s7 + $0x3c] sm:$0xf]
        %v959 = vunpack.c.l.b16 %v911
        %v960 = vunpack.c.l.b16 %v912
        %v961 = vunpack.c.l.b16 %v913
        %v962 = vunpack.c.l.b16 %v914
        %v963 = vunpack.c.l.b16 %v915
        %v964 = vunpack.c.l.b16 %v916
        %v965 = vunpack.c.l.b16 %v917
        %v966 = vunpack.c.l.b16 %v918
        %v967 = vunpack.c.l.b16 %v919
        %v968 = vunpack.c.l.b16 %v920
        %v969 = vunpack.c.l.b16 %v921
        %v970 = vunpack.c.l.b16 %v922
        %v971 = vunpack.c.l.b16 %v923
        %v972 = vunpack.c.l.b16 %v924
        %v973 = vunpack.c.l.b16 %v925
        %v974 = vunpack.c.l.b16 %v926
        %v975 = vpack.c.b16 %v960, %v959
        %v976 = vpack.c.b16 %v962, %v961
        %v977 = vpack.c.b16 %v964, %v963
        %v978 = vpack.c.b16 %v966, %v965
        %v979 = vpack.c.b16 %v968, %v967
        %v980 = vpack.c.b16 %v970, %v969
        %v981 = vpack.c.b16 %v972, %v971
        %v982 = vpack.c.b16 %v974, %v973
        %v1007 = vunpack.c.l.b16 %v927
        %v1008 = vunpack.c.l.b16 %v928
        %v1009 = vunpack.c.l.b16 %v929
        %v1010 = vunpack.c.l.b16 %v930
        %v1011 = vunpack.c.l.b16 %v931
        %v1012 = vunpack.c.l.b16 %v932
        %v1013 = vunpack.c.l.b16 %v933
        %v1014 = vunpack.c.l.b16 %v934
        %v1015 = vunpack.c.l.b16 %v935
        %v1016 = vunpack.c.l.b16 %v936
        %v1017 = vunpack.c.l.b16 %v937
        %v1018 = vunpack.c.l.b16 %v938
        %v1019 = vunpack.c.l.b16 %v939
        %v1020 = vunpack.c.l.b16 %v940
        %v1021 = vunpack.c.l.b16 %v941
        %v1022 = vunpack.c.l.b16 %v942
        %v1023 = vpack.c.b16 %v1008, %v1007
        %v1024 = vpack.c.b16 %v1010, %v1009
        %v1025 = vpack.c.b16 %v1012, %v1011
        %v1026 = vpack.c.b16 %v1014, %v1013
        %v1027 = vpack.c.b16 %v1016, %v1015
        %v1028 = vpack.c.b16 %v1018, %v1017
        %v1029 = vpack.c.b16 %v1020, %v1019
        %v1030 = vpack.c.b16 %v1022, %v1021
        %1039 = vmatprep.subr.bf16.mxu0 0
        %1040 = vmatpush1.bf16.msra.mxu0 %v1030
        %1041 = vmatprep.subr.bf16.mxu0 0
        %1042 = vmatpush1.bf16.msra.mxu0 %v1029
        %1043 = vmatprep.subr.bf16.mxu0 0
        %1044 = vmatpush1.bf16.msra.mxu0 %v1028
        %1045 = vmatprep.subr.bf16.mxu0 0
        %1046 = vmatpush1.bf16.msra.mxu0 %v1027
        %1047 = vmatprep.subr.bf16.mxu0 0
        %1048 = vmatpush1.bf16.msra.mxu0 %v1026
        %1049 = vmatprep.subr.bf16.mxu0 0
        %1050 = vmatpush1.bf16.msra.mxu0 %v1025
        %1051 = vmatprep.subr.bf16.mxu0 0
        %1052 = vmatpush1.bf16.msra.mxu0 %v1024
        %1053 = vmatprep.subr.bf16.mxu0 0
        %1054 = vmatpush1.bf16.msra.mxu0 %v1023
        %1055 = vmatprep.subr.bf16.mxu0 0
        %1056 = vmatpush2.bf16.msra.mxu0 0
        %1057 = vmatprep.subr.bf16.mxu0 0
        %1058 = vmatpush2.bf16.msra.mxu0 0
        %1059 = vmatprep.subr.bf16.mxu0 0
        %1060 = vmatpush2.bf16.msra.mxu0 0
        %1061 = vmatprep.subr.bf16.mxu0 0
        %1062 = vmatpush2.bf16.msra.mxu0 0
        %1063 = vmatprep.subr.bf16.mxu0 0
        %1064 = vmatpush2.bf16.msra.mxu0 0
        %1065 = vmatprep.subr.bf16.mxu0 0
        %1066 = vmatpush2.bf16.msra.mxu0 0
        %1067 = vmatprep.subr.bf16.mxu0 0
        %1068 = vmatpush2.bf16.msra.mxu0 0
        %1069 = vmatprep.subr.bf16.mxu0 0
        %1070 = vmatpush2.bf16.msra.mxu0 0
        %1071 = vmatprep.mubr.bf16.mxu0 0
        %1072 = vmatmul.mubr.bf16.gmra.mxu0 %v975
        %v1073 = vpop.f32.mrf.mxu0
        %v1074 = vadd.f32 0.0, %v1073
        %v1075 = vpop.f32.mrf.mxu0
        %v1076 = vpop.f32.mrf.mxu0
        %v1077 = vadd.f32 0.0, %v1076
        %v1078 = vpop.f32.mrf.mxu0
        %1079 = vmatprep.mubr.bf16.mxu0 0
        %1080 = vmatmul.mubr.bf16.gmra.mxu0 %v976
        %v1081 = vpop.f32.mrf.mxu0
        %v1082 = vadd.f32 0.0, %v1081
        %v1083 = vpop.f32.mrf.mxu0
        %v1084 = vpop.f32.mrf.mxu0
        %v1085 = vadd.f32 0.0, %v1084
        %v1086 = vpop.f32.mrf.mxu0
        %1087 = vmatprep.mubr.bf16.mxu0 0
        %1088 = vmatmul.mubr.bf16.gmra.mxu0 %v977
        %v1089 = vpop.f32.mrf.mxu0
        %v1090 = vadd.f32 0.0, %v1089
        %v1091 = vpop.f32.mrf.mxu0
        %v1092 = vpop.f32.mrf.mxu0
        %v1093 = vadd.f32 0.0, %v1092
        %v1094 = vpop.f32.mrf.mxu0
        %1095 = vmatprep.mubr.bf16.mxu0 0
        %1096 = vmatmul.mubr.bf16.gmra.mxu0 %v978
        %v1097 = vpop.f32.mrf.mxu0
        %v1098 = vadd.f32 0.0, %v1097
        %v1099 = vpop.f32.mrf.mxu0
        %v1100 = vpop.f32.mrf.mxu0
        %v1101 = vadd.f32 0.0, %v1100
        %v1102 = vpop.f32.mrf.mxu0
        %1103 = vmatprep.mubr.bf16.mxu0 0
        %1104 = vmatmul.mubr.bf16.gmra.mxu0 %v979
        %v1105 = vpop.f32.mrf.mxu0
        %v1106 = vadd.f32 0.0, %v1105
        %v1107 = vpop.f32.mrf.mxu0
        %v1108 = vpop.f32.mrf.mxu0
        %v1109 = vadd.f32 0.0, %v1108
        %v1110 = vpop.f32.mrf.mxu0
        %1111 = vmatprep.mubr.bf16.mxu0 0
        %1112 = vmatmul.mubr.bf16.gmra.mxu0 %v980
        %v1113 = vpop.f32.mrf.mxu0
        %v1114 = vadd.f32 0.0, %v1113
        %v1115 = vpop.f32.mrf.mxu0
        %v1116 = vpop.f32.mrf.mxu0
        %v1117 = vadd.f32 0.0, %v1116
        %v1118 = vpop.f32.mrf.mxu0
        %1119 = vmatprep.mubr.bf16.mxu0 0
        %1120 = vmatmul.mubr.bf16.gmra.mxu0 %v981
        %v1121 = vpop.f32.mrf.mxu0
        %v1122 = vadd.f32 0.0, %v1121
        %v1123 = vpop.f32.mrf.mxu0
        %v1124 = vpop.f32.mrf.mxu0
        %v1125 = vadd.f32 0.0, %v1124
        %v1126 = vpop.f32.mrf.mxu0
        %1127 = vmatprep.mubr.bf16.mxu0 0
        %1128 = vmatmul.mubr.bf16.gmra.mxu0 %v982
        %v1129 = vpop.f32.mrf.mxu0
        %v1130 = vadd.f32 0.0, %v1129
        %v1131 = vpop.f32.mrf.mxu0
        %v1132 = vpop.f32.mrf.mxu0
        %v1133 = vadd.f32 0.0, %v1132
        %v1134 = vpop.f32.mrf.mxu0
        %1135 = vdwg.mxu0
        %vm1136 = vcmask 64512
        %v1138 = vsel %vm1136, %v798, 0
        %v1141 = vsel %vm1136, %v799, 0
        %v1144 = vsel %vm1136, %v800, 0
        %v1147 = vsel %vm1136, %v801, 0
        %v1150 = vsel %vm1136, %v802, 0
        %v1153 = vsel %vm1136, %v803, 0
        %v1156 = vsel %vm1136, %v804, 0
        %v1159 = vsel %vm1136, %v805, 0
        %vm1161 = vcmask 1043456
        %v1163 = vsel %vm1161, %v910, 0
        %1165 = vmatprep.subr.bf16.mxu0 0
        %1166 = vmatpush1.bf16.msra.mxu0 0
        %1167 = vmatprep.subr.bf16.mxu0 0
        %1168 = vmatpush1.bf16.msra.mxu0 0
        %1169 = vmatprep.subr.bf16.mxu0 0
        %1170 = vmatpush1.bf16.msra.mxu0 0
        %1171 = vmatprep.subr.bf16.mxu0 0
        %1172 = vmatpush1.bf16.msra.mxu0 0
        %1173 = vmatprep.subr.bf16.mxu0 0
        %1174 = vmatpush1.bf16.msra.mxu0 0
        %1175 = vmatprep.subr.bf16.mxu0 0
        %1176 = vmatpush1.bf16.msra.mxu0 0
        %1177 = vmatprep.subr.bf16.mxu0 0
        %1178 = vmatpush1.bf16.msra.mxu0 0
        %1179 = vmatprep.subr.bf16.mxu0 0
        %1180 = vmatpush1.bf16.msra.mxu0 %v1163
        %1181 = vmatprep.subr.bf16.mxu0 0
        %1182 = vmatpush2.bf16.msra.mxu0 0
        %1183 = vmatprep.subr.bf16.mxu0 0
        %1184 = vmatpush2.bf16.msra.mxu0 0
        %1185 = vmatprep.subr.bf16.mxu0 0
        %1186 = vmatpush2.bf16.msra.mxu0 0
        %1187 = vmatprep.subr.bf16.mxu0 0
        %1188 = vmatpush2.bf16.msra.mxu0 0
        %1189 = vmatprep.subr.bf16.mxu0 0
        %1190 = vmatpush2.bf16.msra.mxu0 0
        %1191 = vmatprep.subr.bf16.mxu0 0
        %1192 = vmatpush2.bf16.msra.mxu0 0
        %1193 = vmatprep.subr.bf16.mxu0 0
        %1194 = vmatpush2.bf16.msra.mxu0 0
        %1195 = vmatprep.subr.bf16.mxu0 0
        %1196 = vmatpush2.bf16.msra.mxu0 0
        %1197 = vmatprep.mubr.bf16.mxu0 0
        %1198 = vmatmul.mubr.bf16.gmra.mxu0 %v1138
        %v1199 = vpop.f32.mrf.mxu0
        %v1200 = vadd.f32 %v1074, %v1199
        %v1201 = vpop.f32.mrf.mxu0
        %v1202 = vpop.f32.mrf.mxu0
        %v1203 = vadd.f32 %v1077, %v1202
        %v1204 = vpop.f32.mrf.mxu0
        %1205 = vmatprep.mubr.bf16.mxu0 0
        %1206 = vmatmul.mubr.bf16.gmra.mxu0 %v1141
        %v1207 = vpop.f32.mrf.mxu0
        %v1208 = vadd.f32 %v1082, %v1207
        %v1209 = vpop.f32.mrf.mxu0
        %v1210 = vpop.f32.mrf.mxu0
        %v1211 = vadd.f32 %v1085, %v1210
        %v1212 = vpop.f32.mrf.mxu0
        %1213 = vmatprep.mubr.bf16.mxu0 0
        %1214 = vmatmul.mubr.bf16.gmra.mxu0 %v1144
        %v1215 = vpop.f32.mrf.mxu0
        %v1216 = vadd.f32 %v1090, %v1215
        %v1217 = vpop.f32.mrf.mxu0
        %v1218 = vpop.f32.mrf.mxu0
        %v1219 = vadd.f32 %v1093, %v1218
        %v1220 = vpop.f32.mrf.mxu0
        %1221 = vmatprep.mubr.bf16.mxu0 0
        %1222 = vmatmul.mubr.bf16.gmra.mxu0 %v1147
        %v1223 = vpop.f32.mrf.mxu0
        %v1224 = vadd.f32 %v1098, %v1223
        %v1225 = vpop.f32.mrf.mxu0
        %v1226 = vpop.f32.mrf.mxu0
        %v1227 = vadd.f32 %v1101, %v1226
        %v1228 = vpop.f32.mrf.mxu0
        %1229 = vmatprep.mubr.bf16.mxu0 0
        %1230 = vmatmul.mubr.bf16.gmra.mxu0 %v1150
        %v1231 = vpop.f32.mrf.mxu0
        %v1232 = vadd.f32 %v1106, %v1231
        %v1233 = vpop.f32.mrf.mxu0
        %v1234 = vpop.f32.mrf.mxu0
        %v1235 = vadd.f32 %v1109, %v1234
        %v1236 = vpop.f32.mrf.mxu0
        %1237 = vmatprep.mubr.bf16.mxu0 0
        %1238 = vmatmul.mubr.bf16.gmra.mxu0 %v1153
        %v1239 = vpop.f32.mrf.mxu0
        %v1240 = vadd.f32 %v1114, %v1239
        %v1241 = vpop.f32.mrf.mxu0
        %v1242 = vpop.f32.mrf.mxu0
        %v1243 = vadd.f32 %v1117, %v1242
        %v1244 = vpop.f32.mrf.mxu0
        %1245 = vmatprep.mubr.bf16.mxu0 0
        %1246 = vmatmul.mubr.bf16.gmra.mxu0 %v1156
        %v1247 = vpop.f32.mrf.mxu0
        %v1248 = vadd.f32 %v1122, %v1247
        %v1249 = vpop.f32.mrf.mxu0
        %v1250 = vpop.f32.mrf.mxu0
        %v1251 = vadd.f32 %v1125, %v1250
        %v1252 = vpop.f32.mrf.mxu0
        %1253 = vmatprep.mubr.bf16.mxu0 0
        %1254 = vmatmul.mubr.bf16.gmra.mxu0 %v1159
        %v1255 = vpop.f32.mrf.mxu0
        %v1256 = vadd.f32 %v1130, %v1255
        %v1257 = vpop.f32.mrf.mxu0
        %v1258 = vpop.f32.mrf.mxu0
        %v1259 = vadd.f32 %v1133, %v1258
        %v1260 = vpop.f32.mrf.mxu0
        %1261 = vdwg.mxu0
        %v1262 = vld [vmem:[%s6] sm:$0xf]
        %v1264 = vsel %vm1136, %v902, 0
        %v1267 = vsel %vm1136, %v903, 0
        %v1270 = vsel %vm1136, %v904, 0
        %v1273 = vsel %vm1136, %v905, 0
        %v1276 = vsel %vm1136, %v906, 0
        %v1279 = vsel %vm1136, %v907, 0
        %v1282 = vsel %vm1136, %v908, 0
        %v1285 = vsel %vm1136, %v909, 0
        %v1288 = vsel %vm1161, %v1262, 0
        %1290 = vmatprep.subr.bf16.mxu0 0
        %1291 = vmatpush1.bf16.msra.mxu0 0
        %1292 = vmatprep.subr.bf16.mxu0 0
        %1293 = vmatpush1.bf16.msra.mxu0 0
        %1294 = vmatprep.subr.bf16.mxu0 0
        %1295 = vmatpush1.bf16.msra.mxu0 0
        %1296 = vmatprep.subr.bf16.mxu0 0
        %1297 = vmatpush1.bf16.msra.mxu0 0
        %1298 = vmatprep.subr.bf16.mxu0 0
        %1299 = vmatpush1.bf16.msra.mxu0 0
        %1300 = vmatprep.subr.bf16.mxu0 0
        %1301 = vmatpush1.bf16.msra.mxu0 0
        %1302 = vmatprep.subr.bf16.mxu0 0
        %1303 = vmatpush1.bf16.msra.mxu0 0
        %1304 = vmatprep.subr.bf16.mxu0 0
        %1305 = vmatpush1.bf16.msra.mxu0 %v1288
        %1306 = vmatprep.subr.bf16.mxu0 0
        %1307 = vmatpush2.bf16.msra.mxu0 0
        %1308 = vmatprep.subr.bf16.mxu0 0
        %1309 = vmatpush2.bf16.msra.mxu0 0
        %1310 = vmatprep.subr.bf16.mxu0 0
        %1311 = vmatpush2.bf16.msra.mxu0 0
        %1312 = vmatprep.subr.bf16.mxu0 0
        %1313 = vmatpush2.bf16.msra.mxu0 0
        %1314 = vmatprep.subr.bf16.mxu0 0
        %1315 = vmatpush2.bf16.msra.mxu0 0
        %1316 = vmatprep.subr.bf16.mxu0 0
        %1317 = vmatpush2.bf16.msra.mxu0 0
        %1318 = vmatprep.subr.bf16.mxu0 0
        %1319 = vmatpush2.bf16.msra.mxu0 0
        %1320 = vmatprep.subr.bf16.mxu0 0
        %1321 = vmatpush2.bf16.msra.mxu0 0
        %1322 = vmatprep.mubr.bf16.mxu0 0
        %1323 = vmatmul.mubr.bf16.gmra.mxu0 %v1264
        %v1324 = vpop.f32.mrf.mxu0
        %v1325 = vadd.f32 0.0, %v1324
        %v1326 = vpop.f32.mrf.mxu0
        %v1327 = vpop.f32.mrf.mxu0
        %v1328 = vadd.f32 0.0, %v1327
        %v1329 = vpop.f32.mrf.mxu0
        %1330 = vmatprep.mubr.bf16.mxu0 0
        %1331 = vmatmul.mubr.bf16.gmra.mxu0 %v1267
        %v1332 = vpop.f32.mrf.mxu0
        %v1333 = vadd.f32 0.0, %v1332
        %v1334 = vpop.f32.mrf.mxu0
        %v1335 = vpop.f32.mrf.mxu0
        %v1336 = vadd.f32 0.0, %v1335
        %v1337 = vpop.f32.mrf.mxu0
        %1338 = vmatprep.mubr.bf16.mxu0 0
        %1339 = vmatmul.mubr.bf16.gmra.mxu0 %v1270
        %v1340 = vpop.f32.mrf.mxu0
        %v1341 = vadd.f32 0.0, %v1340
        %v1342 = vpop.f32.mrf.mxu0
        %v1343 = vpop.f32.mrf.mxu0
        %v1344 = vadd.f32 0.0, %v1343
        %v1345 = vpop.f32.mrf.mxu0
        %1346 = vmatprep.mubr.bf16.mxu0 0
        %1347 = vmatmul.mubr.bf16.gmra.mxu0 %v1273
        %v1348 = vpop.f32.mrf.mxu0
        %v1349 = vadd.f32 0.0, %v1348
        %v1350 = vpop.f32.mrf.mxu0
        %v1351 = vpop.f32.mrf.mxu0
        %v1352 = vadd.f32 0.0, %v1351
        %v1353 = vpop.f32.mrf.mxu0
        %1354 = vmatprep.mubr.bf16.mxu0 0
        %1355 = vmatmul.mubr.bf16.gmra.mxu0 %v1276
        %v1356 = vpop.f32.mrf.mxu0
        %v1357 = vadd.f32 0.0, %v1356
        %v1358 = vpop.f32.mrf.mxu0
        %v1359 = vpop.f32.mrf.mxu0
        %v1360 = vadd.f32 0.0, %v1359
        %v1361 = vpop.f32.mrf.mxu0
        %1362 = vmatprep.mubr.bf16.mxu0 0
        %1363 = vmatmul.mubr.bf16.gmra.mxu0 %v1279
        %v1364 = vpop.f32.mrf.mxu0
        %v1365 = vadd.f32 0.0, %v1364
        %v1366 = vpop.f32.mrf.mxu0
        %v1367 = vpop.f32.mrf.mxu0
        %v1368 = vadd.f32 0.0, %v1367
        %v1369 = vpop.f32.mrf.mxu0
        %1370 = vmatprep.mubr.bf16.mxu0 0
        %1371 = vmatmul.mubr.bf16.gmra.mxu0 %v1282
        %v1372 = vpop.f32.mrf.mxu0
        %v1373 = vadd.f32 0.0, %v1372
        %v1374 = vpop.f32.mrf.mxu0
        %v1375 = vpop.f32.mrf.mxu0
        %v1376 = vadd.f32 0.0, %v1375
        %v1377 = vpop.f32.mrf.mxu0
        %1378 = vmatprep.mubr.bf16.mxu0 0
        %1379 = vmatmul.mubr.bf16.gmra.mxu0 %v1285
        %v1380 = vpop.f32.mrf.mxu0
        %v1381 = vadd.f32 0.0, %v1380
        %v1382 = vpop.f32.mrf.mxu0
        %v1383 = vpop.f32.mrf.mxu0
        %v1384 = vadd.f32 0.0, %v1383
        %v1385 = vpop.f32.mrf.mxu0
        %1386 = vdwg.mxu0
        %v1387 = vadd.f32 %v1200, %v1325
        %v1388 = vadd.f32 %v1203, %v1328
        %v1389 = vadd.f32 %v1208, %v1333
        %v1390 = vadd.f32 %v1211, %v1336
        %v1391 = vadd.f32 %v1216, %v1341
        %v1392 = vadd.f32 %v1219, %v1344
        %v1393 = vadd.f32 %v1224, %v1349
        %v1394 = vadd.f32 %v1227, %v1352
        %v1395 = vadd.f32 %v1232, %v1357
        %v1396 = vadd.f32 %v1235, %v1360
        %v1397 = vadd.f32 %v1240, %v1365
        %v1398 = vadd.f32 %v1243, %v1368
        %v1399 = vadd.f32 %v1248, %v1373
        %v1400 = vadd.f32 %v1251, %v1376
        %v1401 = vadd.f32 %v1256, %v1381
        %v1402 = vadd.f32 %v1259, %v1384
        %v1403 = vld [vmem:[%s8] sm:$0x1]
        %v1405 = vlaneseq
        %v1406 = vshrl.u32 %v1405, 7
        %v1407 = vsub.s32 0, %v1406
        %v1408 = vrot.slane %v1403, %v1407
        %v1410 = vadd.f32 %v1387, %v1408
        %v1411 = vadd.f32 %v1388, %v1408
        %v1412 = vadd.f32 %v1389, %v1408
        %v1413 = vadd.f32 %v1390, %v1408
        %v1414 = vadd.f32 %v1391, %v1408
        %v1415 = vadd.f32 %v1392, %v1408
        %v1416 = vadd.f32 %v1393, %v1408
        %v1417 = vadd.f32 %v1394, %v1408
        %v1418 = vadd.f32 %v1395, %v1408
        %v1419 = vadd.f32 %v1396, %v1408
        %v1420 = vadd.f32 %v1397, %v1408
        %v1421 = vadd.f32 %v1398, %v1408
        %v1422 = vadd.f32 %v1399, %v1408
        %v1423 = vadd.f32 %v1400, %v1408
        %v1424 = vadd.f32 %v1401, %v1408
        %v1425 = vadd.f32 %v1402, %v1408
        %v1426 = vmax.f32 %v1410, 0.0
        %v1427 = vmax.f32 %v1411, 0.0
        %v1428 = vmax.f32 %v1412, 0.0
        %v1429 = vmax.f32 %v1413, 0.0
        %v1430 = vmax.f32 %v1414, 0.0
        %v1431 = vmax.f32 %v1415, 0.0
        %v1432 = vmax.f32 %v1416, 0.0
        %v1433 = vmax.f32 %v1417, 0.0
        %v1434 = vmax.f32 %v1418, 0.0
        %v1435 = vmax.f32 %v1419, 0.0
        %v1436 = vmax.f32 %v1420, 0.0
        %v1437 = vmax.f32 %v1421, 0.0
        %v1438 = vmax.f32 %v1422, 0.0
        %v1439 = vmax.f32 %v1423, 0.0
        %v1440 = vmax.f32 %v1424, 0.0
        %v1441 = vmax.f32 %v1425, 0.0
        %v1442 = vpack.c.bf16 %v1427, %v1426
        %v1443 = vpack.c.bf16 %v1429, %v1428
        %v1444 = vpack.c.bf16 %v1431, %v1430
        %v1445 = vpack.c.bf16 %v1433, %v1432
        %v1446 = vpack.c.bf16 %v1435, %v1434
        %v1447 = vpack.c.bf16 %v1437, %v1436
        %v1448 = vpack.c.bf16 %v1439, %v1438
        %v1449 = vpack.c.bf16 %v1441, %v1440
        %v1450 = vld [vmem:[%s9] sm:$0xff]
        %v1451 = vld [vmem:[%s9 + $0x8] sm:$0xf]
        %v1452 = vld [vmem:[%s9 + $0xc] sm:$0xff]
        %v1453 = vld [vmem:[%s9 + $0x14] sm:$0xf]
        %v1454 = vld [vmem:[%s9 + $0x18] sm:$0xff]
        %v1455 = vld [vmem:[%s9 + $0x20] sm:$0xf]
        %v1456 = vld [vmem:[%s9 + $0x24] sm:$0xff]
        %v1457 = vld [vmem:[%s9 + $0x2c] sm:$0xf]
        %v1458 = vld [vmem:[%s9 + $0x30] sm:$0xff]
        %v1459 = vld [vmem:[%s9 + $0x38] sm:$0xf]
        %v1460 = vld [vmem:[%s9 + $0x3c] sm:$0xff]
        %v1461 = vld [vmem:[%s9 + $0x44] sm:$0xf]
        %v1462 = vld [vmem:[%s9 + $0x48] sm:$0xff]
        %v1463 = vld [vmem:[%s9 + $0x50] sm:$0xf]
        %v1464 = vld [vmem:[%s9 + $0x54] sm:$0xff]
        %v1465 = vld [vmem:[%s9 + $0x5c] sm:$0xf]
        %v1466 = vld [vmem:[%s9 + $0x60] sm:$0xff]
        %v1467 = vld [vmem:[%s9 + $0x68] sm:$0xf]
        %v1468 = vld [vmem:[%s9 + $0x6c] sm:$0xff]
        %v1469 = vld [vmem:[%s9 + $0x74] sm:$0xf]
        %v1470 = vld [vmem:[%s9 + $0x78] sm:$0xff]
        %v1471 = vld [vmem:[%s9 + $0x80] sm:$0xf]
        %v1472 = vld [vmem:[%s9 + $0x84] sm:$0xff]
        %v1473 = vld [vmem:[%s9 + $0x8c] sm:$0xf]
        %v1474 = vld [vmem:[%s9 + $0x90] sm:$0xff]
        %v1475 = vld [vmem:[%s9 + $0x98] sm:$0xf]
        %v1476 = vld [vmem:[%s9 + $0x9c] sm:$0xff]
        %v1477 = vld [vmem:[%s9 + $0xa4] sm:$0xf]
        %v1478 = vld [vmem:[%s9 + $0xa8] sm:$0xff]
        %v1479 = vld [vmem:[%s9 + $0xb0] sm:$0xf]
        %v1480 = vld [vmem:[%s9 + $0xb4] sm:$0xff]
        %v1481 = vld [vmem:[%s9 + $0xbc] sm:$0xf]
        %v1482 = vld [vmem:[%s10] sm:$0x7]
        %v1484 = vlaneseq
        %v1485 = vshrl.u32 %v1484, 7
        %v1486 = vsub.s32 0, %v1485
        %v1487 = vrot.slane %v1482, %v1486
        %v1488 = vlaneseq
        %v1489 = vshrl.u32 %v1488, 7
        %v1490 = vsub.s32 1, %v1489
        %v1491 = vrot.slane %v1482, %v1490
        %v1492 = vlaneseq
        %v1493 = vshrl.u32 %v1492, 7
        %v1494 = vsub.s32 2, %v1493
        %v1495 = vrot.slane %v1482, %v1494
        %v1531 = vunpack.c.l.b16 %v1450
        %v1532 = vunpack.c.h.b16 %v1450
        %v1533 = vunpack.c.l.b16 %v1451
        %v1534 = vunpack.c.l.b16 %v1452
        %v1535 = vunpack.c.h.b16 %v1452
        %v1536 = vunpack.c.l.b16 %v1453
        %v1537 = vunpack.c.l.b16 %v1454
        %v1538 = vunpack.c.h.b16 %v1454
        %v1539 = vunpack.c.l.b16 %v1455
        %v1540 = vunpack.c.l.b16 %v1456
        %v1541 = vunpack.c.h.b16 %v1456
        %v1542 = vunpack.c.l.b16 %v1457
        %v1543 = vunpack.c.l.b16 %v1458
        %v1544 = vunpack.c.h.b16 %v1458
        %v1545 = vunpack.c.l.b16 %v1459
        %v1546 = vunpack.c.l.b16 %v1460
        %v1547 = vunpack.c.h.b16 %v1460
        %v1548 = vunpack.c.l.b16 %v1461
        %v1549 = vunpack.c.l.b16 %v1462
        %v1550 = vunpack.c.h.b16 %v1462
        %v1551 = vunpack.c.l.b16 %v1463
        %v1552 = vunpack.c.l.b16 %v1464
        %v1553 = vunpack.c.h.b16 %v1464
        %v1554 = vunpack.c.l.b16 %v1465
        %v1555 = vunpack.c.l.b16 %v1466
        %v1556 = vunpack.c.h.b16 %v1466
        %v1557 = vunpack.c.l.b16 %v1467
        %v1558 = vunpack.c.l.b16 %v1468
        %v1559 = vunpack.c.h.b16 %v1468
        %v1560 = vunpack.c.l.b16 %v1469
        %v1561 = vunpack.c.l.b16 %v1470
        %v1562 = vunpack.c.h.b16 %v1470
        %v1563 = vunpack.c.l.b16 %v1471
        %v1564 = vunpack.c.l.b16 %v1472
        %v1565 = vunpack.c.h.b16 %v1472
        %v1566 = vunpack.c.l.b16 %v1473
        %v1567 = vunpack.c.l.b16 %v1474
        %v1568 = vunpack.c.h.b16 %v1474
        %v1569 = vunpack.c.l.b16 %v1475
        %v1570 = vunpack.c.l.b16 %v1476
        %v1571 = vunpack.c.h.b16 %v1476
        %v1572 = vunpack.c.l.b16 %v1477
        %v1573 = vunpack.c.l.b16 %v1478
        %v1574 = vunpack.c.h.b16 %v1478
        %v1575 = vunpack.c.l.b16 %v1479
        %v1576 = vunpack.c.l.b16 %v1480
        %v1577 = vunpack.c.h.b16 %v1480
        %v1578 = vunpack.c.l.b16 %v1481
        %v1579 = vpack.c.b16 %v1534, %v1531
        %v1580 = vpack.c.b16 %v1535, %v1532
        %v1581 = vpack.c.b16 %v1536, %v1533
        %v1582 = vpack.c.b16 %v1540, %v1537
        %v1583 = vpack.c.b16 %v1541, %v1538
        %v1584 = vpack.c.b16 %v1542, %v1539
        %v1585 = vpack.c.b16 %v1546, %v1543
        %v1586 = vpack.c.b16 %v1547, %v1544
        %v1587 = vpack.c.b16 %v1548, %v1545
        %v1588 = vpack.c.b16 %v1552, %v1549
        %v1589 = vpack.c.b16 %v1553, %v1550
        %v1590 = vpack.c.b16 %v1554, %v1551
        %v1591 = vpack.c.b16 %v1558, %v1555
        %v1592 = vpack.c.b16 %v1559, %v1556
        %v1593 = vpack.c.b16 %v1560, %v1557
        %v1594 = vpack.c.b16 %v1564, %v1561
        %v1595 = vpack.c.b16 %v1565, %v1562
        %v1596 = vpack.c.b16 %v1566, %v1563
        %v1597 = vpack.c.b16 %v1570, %v1567
        %v1598 = vpack.c.b16 %v1571, %v1568
        %v1599 = vpack.c.b16 %v1572, %v1569
        %v1600 = vpack.c.b16 %v1576, %v1573
        %v1601 = vpack.c.b16 %v1577, %v1574
        %v1602 = vpack.c.b16 %v1578, %v1575
        %1627 = vmatprep.subr.bf16.mxu0 %v1601
        %1628 = vmatpush1.bf16.msra.mxu0 %v1600
        %1629 = vmatprep.subr.bf16.mxu0 %v1598
        %1630 = vmatpush1.bf16.msra.mxu0 %v1597
        %1631 = vmatprep.subr.bf16.mxu0 %v1595
        %1632 = vmatpush1.bf16.msra.mxu0 %v1594
        %1633 = vmatprep.subr.bf16.mxu0 %v1592
        %1634 = vmatpush1.bf16.msra.mxu0 %v1591
        %1635 = vmatprep.subr.bf16.mxu0 %v1589
        %1636 = vmatpush1.bf16.msra.mxu0 %v1588
        %1637 = vmatprep.subr.bf16.mxu0 %v1586
        %1638 = vmatpush1.bf16.msra.mxu0 %v1585
        %1639 = vmatprep.subr.bf16.mxu0 %v1583
        %1640 = vmatpush1.bf16.msra.mxu0 %v1582
        %1641 = vmatprep.subr.bf16.mxu0 %v1580
        %1642 = vmatpush1.bf16.msra.mxu0 %v1579
        %1643 = vmatprep.subr.bf16.mxu0 0
        %1644 = vmatpush2.bf16.msra.mxu0 0
        %1645 = vmatprep.subr.bf16.mxu0 0
        %1646 = vmatpush2.bf16.msra.mxu0 0
        %1647 = vmatprep.subr.bf16.mxu0 0
        %1648 = vmatpush2.bf16.msra.mxu0 0
        %1649 = vmatprep.subr.bf16.mxu0 0
        %1650 = vmatpush2.bf16.msra.mxu0 0
        %1651 = vmatprep.subr.bf16.mxu0 0
        %1652 = vmatpush2.bf16.msra.mxu0 0
        %1653 = vmatprep.subr.bf16.mxu0 0
        %1654 = vmatpush2.bf16.msra.mxu0 0
        %1655 = vmatprep.subr.bf16.mxu0 0
        %1656 = vmatpush2.bf16.msra.mxu0 0
        %1657 = vmatprep.subr.bf16.mxu0 0
        %1658 = vmatpush2.bf16.msra.mxu0 0
        %1659 = vmatprep.mubr.bf16.mxu0 0
        %1660 = vmatmul.mubr.bf16.gmra.mxu0 %v1442
        %v1661 = vpop.f32.mrf.mxu0
        %v1662 = vadd.f32 %v1487, %v1661
        %v1663 = vpop.f32.mrf.mxu0
        %v1664 = vadd.f32 %v1491, %v1663
        %v1665 = vpop.f32.mrf.mxu0
        %v1666 = vadd.f32 %v1487, %v1665
        %v1667 = vpop.f32.mrf.mxu0
        %v1668 = vadd.f32 %v1491, %v1667
        %1669 = vmatprep.mubr.bf16.mxu0 0
        %1670 = vmatmul.mubr.bf16.gmra.mxu0 %v1443
        %v1671 = vpop.f32.mrf.mxu0
        %v1672 = vadd.f32 %v1487, %v1671
        %v1673 = vpop.f32.mrf.mxu0
        %v1674 = vadd.f32 %v1491, %v1673
        %v1675 = vpop.f32.mrf.mxu0
        %v1676 = vadd.f32 %v1487, %v1675
        %v1677 = vpop.f32.mrf.mxu0
        %v1678 = vadd.f32 %v1491, %v1677
        %1679 = vmatprep.mubr.bf16.mxu0 0
        %1680 = vmatmul.mubr.bf16.gmra.mxu0 %v1444
        %v1681 = vpop.f32.mrf.mxu0
        %v1682 = vadd.f32 %v1487, %v1681
        %v1683 = vpop.f32.mrf.mxu0
        %v1684 = vadd.f32 %v1491, %v1683
        %v1685 = vpop.f32.mrf.mxu0
        %v1686 = vadd.f32 %v1487, %v1685
        %v1687 = vpop.f32.mrf.mxu0
        %v1688 = vadd.f32 %v1491, %v1687
        %1689 = vmatprep.mubr.bf16.mxu0 0
        %1690 = vmatmul.mubr.bf16.gmra.mxu0 %v1445
        %v1691 = vpop.f32.mrf.mxu0
        %v1692 = vadd.f32 %v1487, %v1691
        %v1693 = vpop.f32.mrf.mxu0
        %v1694 = vadd.f32 %v1491, %v1693
        %v1695 = vpop.f32.mrf.mxu0
        %v1696 = vadd.f32 %v1487, %v1695
        %v1697 = vpop.f32.mrf.mxu0
        %v1698 = vadd.f32 %v1491, %v1697
        %1699 = vmatprep.mubr.bf16.mxu0 0
        %1700 = vmatmul.mubr.bf16.gmra.mxu0 %v1446
        %v1701 = vpop.f32.mrf.mxu0
        %v1702 = vadd.f32 %v1487, %v1701
        %v1703 = vpop.f32.mrf.mxu0
        %v1704 = vadd.f32 %v1491, %v1703
        %v1705 = vpop.f32.mrf.mxu0
        %v1706 = vadd.f32 %v1487, %v1705
        %v1707 = vpop.f32.mrf.mxu0
        %v1708 = vadd.f32 %v1491, %v1707
        %1709 = vmatprep.mubr.bf16.mxu0 0
        %1710 = vmatmul.mubr.bf16.gmra.mxu0 %v1447
        %v1711 = vpop.f32.mrf.mxu0
        %v1712 = vadd.f32 %v1487, %v1711
        %v1713 = vpop.f32.mrf.mxu0
        %v1714 = vadd.f32 %v1491, %v1713
        %v1715 = vpop.f32.mrf.mxu0
        %v1716 = vadd.f32 %v1487, %v1715
        %v1717 = vpop.f32.mrf.mxu0
        %v1718 = vadd.f32 %v1491, %v1717
        %1719 = vmatprep.mubr.bf16.mxu0 0
        %1720 = vmatmul.mubr.bf16.gmra.mxu0 %v1448
        %v1721 = vpop.f32.mrf.mxu0
        %v1722 = vadd.f32 %v1487, %v1721
        %v1723 = vpop.f32.mrf.mxu0
        %v1724 = vadd.f32 %v1491, %v1723
        %v1725 = vpop.f32.mrf.mxu0
        %v1726 = vadd.f32 %v1487, %v1725
        %v1727 = vpop.f32.mrf.mxu0
        %v1728 = vadd.f32 %v1491, %v1727
        %1729 = vmatprep.mubr.bf16.mxu0 0
        %1730 = vmatmul.mubr.bf16.gmra.mxu0 %v1449
        %v1731 = vpop.f32.mrf.mxu0
        %v1732 = vadd.f32 %v1487, %v1731
        %v1733 = vpop.f32.mrf.mxu0
        %v1734 = vadd.f32 %v1491, %v1733
        %v1735 = vpop.f32.mrf.mxu0
        %v1736 = vadd.f32 %v1487, %v1735
        %v1737 = vpop.f32.mrf.mxu0
        %v1738 = vadd.f32 %v1491, %v1737
        %1739 = vdwg.mxu0
        %1740 = vmatprep.subr.bf16.mxu0 0
        %1741 = vmatpush1.bf16.msra.mxu0 %v1602
        %1742 = vmatprep.subr.bf16.mxu0 0
        %1743 = vmatpush1.bf16.msra.mxu0 %v1599
        %1744 = vmatprep.subr.bf16.mxu0 0
        %1745 = vmatpush1.bf16.msra.mxu0 %v1596
        %1746 = vmatprep.subr.bf16.mxu0 0
        %1747 = vmatpush1.bf16.msra.mxu0 %v1593
        %1748 = vmatprep.subr.bf16.mxu0 0
        %1749 = vmatpush1.bf16.msra.mxu0 %v1590
        %1750 = vmatprep.subr.bf16.mxu0 0
        %1751 = vmatpush1.bf16.msra.mxu0 %v1587
        %1752 = vmatprep.subr.bf16.mxu0 0
        %1753 = vmatpush1.bf16.msra.mxu0 %v1584
        %1754 = vmatprep.subr.bf16.mxu0 0
        %1755 = vmatpush1.bf16.msra.mxu0 %v1581
        %1756 = vmatprep.subr.bf16.mxu0 0
        %1757 = vmatpush2.bf16.msra.mxu0 0
        %1758 = vmatprep.subr.bf16.mxu0 0
        %1759 = vmatpush2.bf16.msra.mxu0 0
        %1760 = vmatprep.subr.bf16.mxu0 0
        %1761 = vmatpush2.bf16.msra.mxu0 0
        %1762 = vmatprep.subr.bf16.mxu0 0
        %1763 = vmatpush2.bf16.msra.mxu0 0
        %1764 = vmatprep.subr.bf16.mxu0 0
        %1765 = vmatpush2.bf16.msra.mxu0 0
        %1766 = vmatprep.subr.bf16.mxu0 0
        %1767 = vmatpush2.bf16.msra.mxu0 0
        %1768 = vmatprep.subr.bf16.mxu0 0
        %1769 = vmatpush2.bf16.msra.mxu0 0
        %1770 = vmatprep.subr.bf16.mxu0 0
        %1771 = vmatpush2.bf16.msra.mxu0 0
        %1772 = vmatprep.mubr.bf16.mxu0 0
        %1773 = vmatmul.mubr.bf16.gmra.mxu0 %v1442
        %v1774 = vpop.f32.mrf.mxu0
        %v1775 = vadd.f32 %v1495, %v1774
        %v1776 = vpop.f32.mrf.mxu0
        %v1777 = vpop.f32.mrf.mxu0
        %v1778 = vadd.f32 %v1495, %v1777
        %v1779 = vpop.f32.mrf.mxu0
        %1780 = vmatprep.mubr.bf16.mxu0 0
        %1781 = vmatmul.mubr.bf16.gmra.mxu0 %v1443
        %v1782 = vpop.f32.mrf.mxu0
        %v1783 = vadd.f32 %v1495, %v1782
        %v1784 = vpop.f32.mrf.mxu0
        %v1785 = vpop.f32.mrf.mxu0
        %v1786 = vadd.f32 %v1495, %v1785
        %v1787 = vpop.f32.mrf.mxu0
        %1788 = vmatprep.mubr.bf16.mxu0 0
        %1789 = vmatmul.mubr.bf16.gmra.mxu0 %v1444
        %v1790 = vpop.f32.mrf.mxu0
        %v1791 = vadd.f32 %v1495, %v1790
        %v1792 = vpop.f32.mrf.mxu0
        %v1793 = vpop.f32.mrf.mxu0
        %v1794 = vadd.f32 %v1495, %v1793
        %v1795 = vpop.f32.mrf.mxu0
        %1796 = vmatprep.mubr.bf16.mxu0 0
        %1797 = vmatmul.mubr.bf16.gmra.mxu0 %v1445
        %v1798 = vpop.f32.mrf.mxu0
        %v1799 = vadd.f32 %v1495, %v1798
        %v1800 = vpop.f32.mrf.mxu0
        %v1801 = vpop.f32.mrf.mxu0
        %v1802 = vadd.f32 %v1495, %v1801
        %v1803 = vpop.f32.mrf.mxu0
        %1804 = vmatprep.mubr.bf16.mxu0 0
        %1805 = vmatmul.mubr.bf16.gmra.mxu0 %v1446
        %v1806 = vpop.f32.mrf.mxu0
        %v1807 = vadd.f32 %v1495, %v1806
        %v1808 = vpop.f32.mrf.mxu0
        %v1809 = vpop.f32.mrf.mxu0
        %v1810 = vadd.f32 %v1495, %v1809
        %v1811 = vpop.f32.mrf.mxu0
        %1812 = vmatprep.mubr.bf16.mxu0 0
        %1813 = vmatmul.mubr.bf16.gmra.mxu0 %v1447
        %v1814 = vpop.f32.mrf.mxu0
        %v1815 = vadd.f32 %v1495, %v1814
        %v1816 = vpop.f32.mrf.mxu0
        %v1817 = vpop.f32.mrf.mxu0
        %v1818 = vadd.f32 %v1495, %v1817
        %v1819 = vpop.f32.mrf.mxu0
        %1820 = vmatprep.mubr.bf16.mxu0 0
        %1821 = vmatmul.mubr.bf16.gmra.mxu0 %v1448
        %v1822 = vpop.f32.mrf.mxu0
        %v1823 = vadd.f32 %v1495, %v1822
        %v1824 = vpop.f32.mrf.mxu0
        %v1825 = vpop.f32.mrf.mxu0
        %v1826 = vadd.f32 %v1495, %v1825
        %v1827 = vpop.f32.mrf.mxu0
        %1828 = vmatprep.mubr.bf16.mxu0 0
        %1829 = vmatmul.mubr.bf16.gmra.mxu0 %v1449
        %v1830 = vpop.f32.mrf.mxu0
        %v1831 = vadd.f32 %v1495, %v1830
        %v1832 = vpop.f32.mrf.mxu0
        %v1833 = vpop.f32.mrf.mxu0
        %v1834 = vadd.f32 %v1495, %v1833
        %v1835 = vpop.f32.mrf.mxu0
        %1836 = vdwg.mxu0
        %v1837 = vmax.f32 %v1662, 0.0
        %v1838 = vmax.f32 %v1664, 0.0
        %v1839 = vmax.f32 %v1775, 0.0
        %v1840 = vmax.f32 %v1666, 0.0
        %v1841 = vmax.f32 %v1668, 0.0
        %v1842 = vmax.f32 %v1778, 0.0
        %v1843 = vmax.f32 %v1672, 0.0
        %v1844 = vmax.f32 %v1674, 0.0
        %v1845 = vmax.f32 %v1783, 0.0
        %v1846 = vmax.f32 %v1676, 0.0
        %v1847 = vmax.f32 %v1678, 0.0
        %v1848 = vmax.f32 %v1786, 0.0
        %v1849 = vmax.f32 %v1682, 0.0
        %v1850 = vmax.f32 %v1684, 0.0
        %v1851 = vmax.f32 %v1791, 0.0
        %v1852 = vmax.f32 %v1686, 0.0
        %v1853 = vmax.f32 %v1688, 0.0
        %v1854 = vmax.f32 %v1794, 0.0
        %v1855 = vmax.f32 %v1692, 0.0
        %v1856 = vmax.f32 %v1694, 0.0
        %v1857 = vmax.f32 %v1799, 0.0
        %v1858 = vmax.f32 %v1696, 0.0
        %v1859 = vmax.f32 %v1698, 0.0
        %v1860 = vmax.f32 %v1802, 0.0
        %v1861 = vmax.f32 %v1702, 0.0
        %v1862 = vmax.f32 %v1704, 0.0
        %v1863 = vmax.f32 %v1807, 0.0
        %v1864 = vmax.f32 %v1706, 0.0
        %v1865 = vmax.f32 %v1708, 0.0
        %v1866 = vmax.f32 %v1810, 0.0
        %v1867 = vmax.f32 %v1712, 0.0
        %v1868 = vmax.f32 %v1714, 0.0
        %v1869 = vmax.f32 %v1815, 0.0
        %v1870 = vmax.f32 %v1716, 0.0
        %v1871 = vmax.f32 %v1718, 0.0
        %v1872 = vmax.f32 %v1818, 0.0
        %v1873 = vmax.f32 %v1722, 0.0
        %v1874 = vmax.f32 %v1724, 0.0
        %v1875 = vmax.f32 %v1823, 0.0
        %v1876 = vmax.f32 %v1726, 0.0
        %v1877 = vmax.f32 %v1728, 0.0
        %v1878 = vmax.f32 %v1826, 0.0
        %v1879 = vmax.f32 %v1732, 0.0
        %v1880 = vmax.f32 %v1734, 0.0
        %v1881 = vmax.f32 %v1831, 0.0
        %v1882 = vmax.f32 %v1736, 0.0
        %v1883 = vmax.f32 %v1738, 0.0
        %v1884 = vmax.f32 %v1834, 0.0
        %1885 = vst [vmem:[%s665] sm:$0xff] %v1838
        %1886 = vst [vmem:[%s665 + $0x8] sm:$0xff] %v1841
        %1887 = vst [vmem:[%s665 + $0x10] sm:$0xff] %v1844
        %1888 = vst [vmem:[%s665 + $0x18] sm:$0xff] %v1847
        %1889 = vst [vmem:[%s665 + $0x20] sm:$0xff] %v1850
        %1890 = vst [vmem:[%s665 + $0x28] sm:$0xff] %v1853
        %1891 = vst [vmem:[%s665 + $0x30] sm:$0xff] %v1856
        %1892 = vst [vmem:[%s665 + $0x38] sm:$0xff] %v1859
        %1893 = vst [vmem:[%s665 + $0x40] sm:$0xff] %v1862
        %1894 = vst [vmem:[%s665 + $0x48] sm:$0xff] %v1865
        %1895 = vst [vmem:[%s665 + $0x50] sm:$0xff] %v1868
        %1896 = vst [vmem:[%s665 + $0x58] sm:$0xff] %v1871
        %1897 = vst [vmem:[%s665 + $0x60] sm:$0xff] %v1874
        %1898 = vst [vmem:[%s665 + $0x68] sm:$0xff] %v1877
        %1899 = vst [vmem:[%s665 + $0x70] sm:$0xff] %v1880
        %1900 = vst [vmem:[%s665 + $0x78] sm:$0xff] %v1883
        %v1901 = vld [vmem:[%s675] sm:$0x3]
        %v1902 = vlaneseq
        %v1903 = vshrl.u32 %v1902, 7
        %v1904 = vlaneseq
        %v1905 = vshrl.u32 %v1904, 7
        %v1906 = vsub.s32 0, %v1905
        %v1907 = vrot.slane %v1901, %v1906
        %vm1908 = vcmp.eq.s32.totalorder %v1903, %v1907
        %v1909 = vsel %vm1908, 1, 0
        %v1910 = vcvt.s32.f32 %v1909
        %v1911 = vpack.c.bf16 %v1910, %v1910
        %v1912 = vlaneseq
        %v1913 = vshrl.u32 %v1912, 7
        %v1914 = vsub.s32 1, %v1913
        %v1915 = vrot.slane %v1901, %v1914
        %vm1916 = vcmp.eq.s32.totalorder %v1903, %v1915
        %v1917 = vsel %vm1916, 1, 0
        %v1918 = vcvt.s32.f32 %v1917
        %v1919 = vpack.c.bf16 %v1918, %v1918
        %v1920 = vld [vmem:[#allocation2] sm:$0xff]
        %v1921 = vpack.c.bf16 %v1840, %v1837
        %v1922 = vpack.c.bf16 %v1846, %v1843
        %v1923 = vpack.c.bf16 %v1852, %v1849
        %v1924 = vpack.c.bf16 %v1858, %v1855
        %v1925 = vpack.c.bf16 %v1864, %v1861
        %v1926 = vpack.c.bf16 %v1870, %v1867
        %v1927 = vpack.c.bf16 %v1876, %v1873
        %v1928 = vpack.c.bf16 %v1882, %v1879
        %v1929 = vpack.c.bf16 %v1842, %v1839
        %v1930 = vpack.c.bf16 %v1848, %v1845
        %v1931 = vpack.c.bf16 %v1854, %v1851
        %v1932 = vpack.c.bf16 %v1860, %v1857
        %v1933 = vpack.c.bf16 %v1866, %v1863
        %v1934 = vpack.c.bf16 %v1872, %v1869
        %v1935 = vpack.c.bf16 %v1878, %v1875
        %v1936 = vpack.c.bf16 %v1884, %v1881
        %1937 = vmatprep.subr.bf16.mxu0 0
        %1938 = vmatpush1.bf16.msra.mxu0 %v1936
        %1939 = vmatprep.subr.bf16.mxu0 0
        %1940 = vmatpush1.bf16.msra.mxu0 %v1935
        %1941 = vmatprep.subr.bf16.mxu0 0
        %1942 = vmatpush1.bf16.msra.mxu0 %v1934
        %1943 = vmatprep.subr.bf16.mxu0 0
        %1944 = vmatpush1.bf16.msra.mxu0 %v1933
        %1945 = vmatprep.subr.bf16.mxu0 0
        %1946 = vmatpush1.bf16.msra.mxu0 %v1932
        %1947 = vmatprep.subr.bf16.mxu0 0
        %1948 = vmatpush1.bf16.msra.mxu0 %v1931
        %1949 = vmatprep.subr.bf16.mxu0 0
        %1950 = vmatpush1.bf16.msra.mxu0 %v1930
        %1951 = vmatprep.subr.bf16.mxu0 0
        %1952 = vmatpush1.bf16.msra.mxu0 %v1929
        %1953 = vmatprep.subr.bf16.mxu0 0
        %1954 = vmatpush2.bf16.msra.mxu0 0
        %1955 = vmatprep.subr.bf16.mxu0 0
        %1956 = vmatpush2.bf16.msra.mxu0 0
        %1957 = vmatprep.subr.bf16.mxu0 0
        %1958 = vmatpush2.bf16.msra.mxu0 0
        %1959 = vmatprep.subr.bf16.mxu0 0
        %1960 = vmatpush2.bf16.msra.mxu0 0
        %1961 = vmatprep.subr.bf16.mxu0 0
        %1962 = vmatpush2.bf16.msra.mxu0 0
        %1963 = vmatprep.subr.bf16.mxu0 0
        %1964 = vmatpush2.bf16.msra.mxu0 0
        %1965 = vmatprep.subr.bf16.mxu0 0
        %1966 = vmatpush2.bf16.msra.mxu0 0
        %1967 = vmatprep.subr.bf16.mxu0 0
        %1968 = vmatpush2.bf16.msra.mxu0 0
        %1969 = vmatprep.mubr.bf16.mxu0 0
        %1970 = vmatmul.mubr.bf16.gmra.mxu0 %v1919
        %v1971 = vpop.f32.mrf.mxu0
        %v1972 = vadd.f32 0.0, %v1971
        %v1973 = vpop.f32.mrf.mxu0
        %v1974 = vpop.f32.mrf.mxu0
        %v1975 = vpop.f32.mrf.mxu0
        %1976 = vdwg.mxu0
        %1977 = vmatprep.subr.bf16.mxu0 0
        %1978 = vmatpush1.bf16.msra.mxu0 %v1928
        %1979 = vmatprep.subr.bf16.mxu0 0
        %1980 = vmatpush1.bf16.msra.mxu0 %v1927
        %1981 = vmatprep.subr.bf16.mxu0 0
        %1982 = vmatpush1.bf16.msra.mxu0 %v1926
        %1983 = vmatprep.subr.bf16.mxu0 0
        %1984 = vmatpush1.bf16.msra.mxu0 %v1925
        %1985 = vmatprep.subr.bf16.mxu0 0
        %1986 = vmatpush1.bf16.msra.mxu0 %v1924
        %1987 = vmatprep.subr.bf16.mxu0 0
        %1988 = vmatpush1.bf16.msra.mxu0 %v1923
        %1989 = vmatprep.subr.bf16.mxu0 0
        %1990 = vmatpush1.bf16.msra.mxu0 %v1922
        %1991 = vmatprep.subr.bf16.mxu0 0
        %1992 = vmatpush1.bf16.msra.mxu0 %v1921
        %1993 = vmatprep.subr.bf16.mxu0 0
        %1994 = vmatpush2.bf16.msra.mxu0 0
        %1995 = vmatprep.subr.bf16.mxu0 0
        %1996 = vmatpush2.bf16.msra.mxu0 0
        %1997 = vmatprep.subr.bf16.mxu0 0
        %1998 = vmatpush2.bf16.msra.mxu0 0
        %1999 = vmatprep.subr.bf16.mxu0 0
        %2000 = vmatpush2.bf16.msra.mxu0 0
        %2001 = vmatprep.subr.bf16.mxu0 0
        %2002 = vmatpush2.bf16.msra.mxu0 0
        %2003 = vmatprep.subr.bf16.mxu0 0
        %2004 = vmatpush2.bf16.msra.mxu0 0
        %2005 = vmatprep.subr.bf16.mxu0 0
        %2006 = vmatpush2.bf16.msra.mxu0 0
        %2007 = vmatprep.subr.bf16.mxu0 0
        %2008 = vmatpush2.bf16.msra.mxu0 0
        %2009 = vmatprep.mubr.bf16.mxu0 0
        %2010 = vmatmul.mubr.bf16.gmra.mxu0 %v1911
        %v2011 = vpop.f32.mrf.mxu0
        %v2012 = vadd.f32 %v1972, %v2011
        %v2013 = vpop.f32.mrf.mxu0
        %v2014 = vpop.f32.mrf.mxu0
        %v2015 = vpop.f32.mrf.mxu0
        %2016 = vdwg.mxu0
        %v2017 = vadd.f32 %v1920, %v2012
        %2018 = vst [vmem:[#allocation2] sm:$0xff] %v2017
        %p2019 = scmp.eq.s32.totalorder %s39, 1
        // Predicated region
        $region109: #{tpu_custom_call.1} parent=87 // pred_check
          %p2020 = pneg %p2019
        $region110: #{tpu_custom_call.1} parent=87 // pred_check_branch
          %2022 = sbr.rel (%p2020) target = $region112
        $region111: #{tpu_custom_call.1} parent=87 // pred_region
          %v2023 = vld [vmem:[#allocation2] sm:$0xff]
          %v2024 = vld [vmem:[%s3] sm:$0xff]
          %2026 = vset.pattern.permute.xlu0 0
          %2027 = vperm.xlu0 %2026, %v2024
          %v2028 = vpop.permute.xlu0 %2027
          %v2030 = vmul.f32 %v2023, %v2028
          %v2031 = vpack.c.bf16 %v2030, %v2030
          %v2032 = vld [vmem:[#allocation6] sm:$0xf]
          %v2033 = vld [vmem:[#allocation6 + $0x4] sm:$0xf]
          %v2034 = vld [vmem:[#allocation6 + $0x8] sm:$0xf]
          %v2035 = vld [vmem:[#allocation6 + $0xc] sm:$0xf]
          %v2036 = vld [vmem:[#allocation6 + $0x10] sm:$0xf]
          %v2037 = vld [vmem:[#allocation6 + $0x14] sm:$0xf]
          %v2038 = vld [vmem:[#allocation6 + $0x18] sm:$0xf]
          %v2039 = vld [vmem:[#allocation6 + $0x1c] sm:$0xf]
          %v2040 = vld [vmem:[#allocation6 + $0x20] sm:$0xf]
          %v2041 = vld [vmem:[#allocation6 + $0x24] sm:$0xf]
          %v2042 = vld [vmem:[#allocation6 + $0x28] sm:$0xf]
          %v2043 = vld [vmem:[#allocation6 + $0x2c] sm:$0xf]
          %v2044 = vld [vmem:[#allocation6 + $0x30] sm:$0xf]
          %v2045 = vld [vmem:[#allocation6 + $0x34] sm:$0xf]
          %v2046 = vld [vmem:[#allocation6 + $0x38] sm:$0xf]
          %v2047 = vld [vmem:[#allocation6 + $0x3c] sm:$0xf]
          %v2048 = vld [vmem:[%s12] sm:$0x1]
          %v2050 = vlaneseq
          %v2051 = vshrl.u32 %v2050, 7
          %v2052 = vsub.s32 0, %v2051
          %v2053 = vrot.slane %v2048, %v2052
          %v2071 = vunpack.c.l.b16 %v2032
          %v2072 = vunpack.c.l.b16 %v2033
          %v2073 = vunpack.c.l.b16 %v2034
          %v2074 = vunpack.c.l.b16 %v2035
          %v2075 = vunpack.c.l.b16 %v2036
          %v2076 = vunpack.c.l.b16 %v2037
          %v2077 = vunpack.c.l.b16 %v2038
          %v2078 = vunpack.c.l.b16 %v2039
          %v2079 = vunpack.c.l.b16 %v2040
          %v2080 = vunpack.c.l.b16 %v2041
          %v2081 = vunpack.c.l.b16 %v2042
          %v2082 = vunpack.c.l.b16 %v2043
          %v2083 = vunpack.c.l.b16 %v2044
          %v2084 = vunpack.c.l.b16 %v2045
          %v2085 = vunpack.c.l.b16 %v2046
          %v2086 = vunpack.c.l.b16 %v2047
          %v2087 = vpack.c.b16 %v2072, %v2071
          %v2088 = vpack.c.b16 %v2074, %v2073
          %v2089 = vpack.c.b16 %v2076, %v2075
          %v2090 = vpack.c.b16 %v2078, %v2077
          %v2091 = vpack.c.b16 %v2080, %v2079
          %v2092 = vpack.c.b16 %v2082, %v2081
          %v2093 = vpack.c.b16 %v2084, %v2083
          %v2094 = vpack.c.b16 %v2086, %v2085
          %2103 = vmatprep.subr.bf16.mxu0 0
          %2104 = vmatpush1.bf16.msra.mxu0 %v2094
          %2105 = vmatprep.subr.bf16.mxu0 0
          %2106 = vmatpush1.bf16.msra.mxu0 %v2093
          %2107 = vmatprep.subr.bf16.mxu0 0
          %2108 = vmatpush1.bf16.msra.mxu0 %v2092
          %2109 = vmatprep.subr.bf16.mxu0 0
          %2110 = vmatpush1.bf16.msra.mxu0 %v2091
          %2111 = vmatprep.subr.bf16.mxu0 0
          %2112 = vmatpush1.bf16.msra.mxu0 %v2090
          %2113 = vmatprep.subr.bf16.mxu0 0
          %2114 = vmatpush1.bf16.msra.mxu0 %v2089
          %2115 = vmatprep.subr.bf16.mxu0 0
          %2116 = vmatpush1.bf16.msra.mxu0 %v2088
          %2117 = vmatprep.subr.bf16.mxu0 0
          %2118 = vmatpush1.bf16.msra.mxu0 %v2087
          %2119 = vmatprep.subr.bf16.mxu0 0
          %2120 = vmatpush2.bf16.msra.mxu0 0
          %2121 = vmatprep.subr.bf16.mxu0 0
          %2122 = vmatpush2.bf16.msra.mxu0 0
          %2123 = vmatprep.subr.bf16.mxu0 0
          %2124 = vmatpush2.bf16.msra.mxu0 0
          %2125 = vmatprep.subr.bf16.mxu0 0
          %2126 = vmatpush2.bf16.msra.mxu0 0
          %2127 = vmatprep.subr.bf16.mxu0 0
          %2128 = vmatpush2.bf16.msra.mxu0 0
          %2129 = vmatprep.subr.bf16.mxu0 0
          %2130 = vmatpush2.bf16.msra.mxu0 0
          %2131 = vmatprep.subr.bf16.mxu0 0
          %2132 = vmatpush2.bf16.msra.mxu0 0
          %2133 = vmatprep.subr.bf16.mxu0 0
          %2134 = vmatpush2.bf16.msra.mxu0 0
          %2135 = vmatprep.mubr.bf16.mxu0 0
          %2136 = vmatmul.mubr.bf16.gmra.mxu0 %v2031
          %v2137 = vpop.f32.mrf.mxu0
          %v2138 = vadd.f32 %v2053, %v2137
          %v2139 = vpop.f32.mrf.mxu0
          %v2140 = vpop.f32.mrf.mxu0
          %v2141 = vpop.f32.mrf.mxu0
          %2142 = vdwg.mxu0
          %v2143 = vmax.f32 %v2138, 0.0
          %v2144 = vpack.c.bf16 %v2143, %v2143
          %v2145 = vld [vmem:[#allocation8] sm:$0xf]
          %v2146 = vld [vmem:[#allocation8 + $0x4] sm:$0xf]
          %v2147 = vld [vmem:[#allocation8 + $0x8] sm:$0xf]
          %v2148 = vld [vmem:[#allocation8 + $0xc] sm:$0xf]
          %v2149 = vld [vmem:[#allocation8 + $0x10] sm:$0xf]
          %v2150 = vld [vmem:[#allocation8 + $0x14] sm:$0xf]
          %v2151 = vld [vmem:[#allocation8 + $0x18] sm:$0xf]
          %v2152 = vld [vmem:[#allocation8 + $0x1c] sm:$0xf]
          %v2153 = vld [vmem:[#allocation8 + $0x20] sm:$0xf]
          %v2154 = vld [vmem:[#allocation8 + $0x24] sm:$0xf]
          %v2155 = vld [vmem:[#allocation8 + $0x28] sm:$0xf]
          %v2156 = vld [vmem:[#allocation8 + $0x2c] sm:$0xf]
          %v2157 = vld [vmem:[#allocation8 + $0x30] sm:$0xf]
          %v2158 = vld [vmem:[#allocation8 + $0x34] sm:$0xf]
          %v2159 = vld [vmem:[#allocation8 + $0x38] sm:$0xf]
          %v2160 = vld [vmem:[#allocation8 + $0x3c] sm:$0xf]
          %v2161 = vld [vmem:[%s14] sm:$0x1]
          %v2163 = vlaneseq
          %v2164 = vshrl.u32 %v2163, 7
          %v2165 = vsub.s32 0, %v2164
          %v2166 = vrot.slane %v2161, %v2165
          %v2184 = vunpack.c.l.b16 %v2145
          %v2185 = vunpack.c.l.b16 %v2146
          %v2186 = vunpack.c.l.b16 %v2147
          %v2187 = vunpack.c.l.b16 %v2148
          %v2188 = vunpack.c.l.b16 %v2149
          %v2189 = vunpack.c.l.b16 %v2150
          %v2190 = vunpack.c.l.b16 %v2151
          %v2191 = vunpack.c.l.b16 %v2152
          %v2192 = vunpack.c.l.b16 %v2153
          %v2193 = vunpack.c.l.b16 %v2154
          %v2194 = vunpack.c.l.b16 %v2155
          %v2195 = vunpack.c.l.b16 %v2156
          %v2196 = vunpack.c.l.b16 %v2157
          %v2197 = vunpack.c.l.b16 %v2158
          %v2198 = vunpack.c.l.b16 %v2159
          %v2199 = vunpack.c.l.b16 %v2160
          %v2200 = vpack.c.b16 %v2185, %v2184
          %v2201 = vpack.c.b16 %v2187, %v2186
          %v2202 = vpack.c.b16 %v2189, %v2188
          %v2203 = vpack.c.b16 %v2191, %v2190
          %v2204 = vpack.c.b16 %v2193, %v2192
          %v2205 = vpack.c.b16 %v2195, %v2194
          %v2206 = vpack.c.b16 %v2197, %v2196
          %v2207 = vpack.c.b16 %v2199, %v2198
          %2216 = vmatprep.subr.bf16.mxu0 0
          %2217 = vmatpush1.bf16.msra.mxu0 %v2207
          %2218 = vmatprep.subr.bf16.mxu0 0
          %2219 = vmatpush1.bf16.msra.mxu0 %v2206
          %2220 = vmatprep.subr.bf16.mxu0 0
          %2221 = vmatpush1.bf16.msra.mxu0 %v2205
          %2222 = vmatprep.subr.bf16.mxu0 0
          %2223 = vmatpush1.bf16.msra.mxu0 %v2204
          %2224 = vmatprep.subr.bf16.mxu0 0
          %2225 = vmatpush1.bf16.msra.mxu0 %v2203
          %2226 = vmatprep.subr.bf16.mxu0 0
          %2227 = vmatpush1.bf16.msra.mxu0 %v2202
          %2228 = vmatprep.subr.bf16.mxu0 0
          %2229 = vmatpush1.bf16.msra.mxu0 %v2201
          %2230 = vmatprep.subr.bf16.mxu0 0
          %2231 = vmatpush1.bf16.msra.mxu0 %v2200
          %2232 = vmatprep.subr.bf16.mxu0 0
          %2233 = vmatpush2.bf16.msra.mxu0 0
          %2234 = vmatprep.subr.bf16.mxu0 0
          %2235 = vmatpush2.bf16.msra.mxu0 0
          %2236 = vmatprep.subr.bf16.mxu0 0
          %2237 = vmatpush2.bf16.msra.mxu0 0
          %2238 = vmatprep.subr.bf16.mxu0 0
          %2239 = vmatpush2.bf16.msra.mxu0 0
          %2240 = vmatprep.subr.bf16.mxu0 0
          %2241 = vmatpush2.bf16.msra.mxu0 0
          %2242 = vmatprep.subr.bf16.mxu0 0
          %2243 = vmatpush2.bf16.msra.mxu0 0
          %2244 = vmatprep.subr.bf16.mxu0 0
          %2245 = vmatpush2.bf16.msra.mxu0 0
          %2246 = vmatprep.subr.bf16.mxu0 0
          %2247 = vmatpush2.bf16.msra.mxu0 0
          %2248 = vmatprep.mubr.bf16.mxu0 0
          %2249 = vmatmul.mubr.bf16.gmra.mxu0 %v2144
          %v2250 = vpop.f32.mrf.mxu0
          %v2251 = vadd.f32 %v2166, %v2250
          %v2252 = vpop.f32.mrf.mxu0
          %v2253 = vpop.f32.mrf.mxu0
          %v2254 = vpop.f32.mrf.mxu0
          %2255 = vdwg.mxu0
          %v2256 = vmax.f32 %v2251, 0.0
          %v2257 = vld [vmem:[%s4] sm:$0xf]
          %v2258 = vld [vmem:[#allocation9] sm:$0xf]
          %v2259 = vld [vmem:[#allocation9 + $0x4] sm:$0xf]
          %v2260 = vld [vmem:[#allocation9 + $0x8] sm:$0xf]
          %v2261 = vld [vmem:[#allocation9 + $0xc] sm:$0xf]
          %v2262 = vld [vmem:[#allocation9 + $0x10] sm:$0xf]
          %v2263 = vld [vmem:[#allocation9 + $0x14] sm:$0xf]
          %v2264 = vld [vmem:[#allocation9 + $0x18] sm:$0xf]
          %v2265 = vld [vmem:[#allocation9 + $0x1c] sm:$0xf]
          %v2266 = vld [vmem:[#allocation9 + $0x20] sm:$0xf]
          %v2267 = vld [vmem:[#allocation9 + $0x24] sm:$0xf]
          %v2268 = vld [vmem:[#allocation9 + $0x28] sm:$0xf]
          %v2269 = vld [vmem:[#allocation9 + $0x2c] sm:$0xf]
          %v2270 = vld [vmem:[#allocation9 + $0x30] sm:$0xf]
          %v2271 = vld [vmem:[#allocation9 + $0x34] sm:$0xf]
          %v2272 = vld [vmem:[#allocation9 + $0x38] sm:$0xf]
          %v2273 = vld [vmem:[#allocation9 + $0x3c] sm:$0xf]
          %v2274 = vld [vmem:[%s16] sm:$0x1]
          %v2276 = vlaneseq
          %v2277 = vshrl.u32 %v2276, 7
          %v2278 = vsub.s32 0, %v2277
          %v2279 = vrot.slane %v2274, %v2278
          %v2297 = vunpack.c.l.b16 %v2258
          %v2298 = vunpack.c.l.b16 %v2259
          %v2299 = vunpack.c.l.b16 %v2260
          %v2300 = vunpack.c.l.b16 %v2261
          %v2301 = vunpack.c.l.b16 %v2262
          %v2302 = vunpack.c.l.b16 %v2263
          %v2303 = vunpack.c.l.b16 %v2264
          %v2304 = vunpack.c.l.b16 %v2265
          %v2305 = vunpack.c.l.b16 %v2266
          %v2306 = vunpack.c.l.b16 %v2267
          %v2307 = vunpack.c.l.b16 %v2268
          %v2308 = vunpack.c.l.b16 %v2269
          %v2309 = vunpack.c.l.b16 %v2270
          %v2310 = vunpack.c.l.b16 %v2271
          %v2311 = vunpack.c.l.b16 %v2272
          %v2312 = vunpack.c.l.b16 %v2273
          %v2313 = vpack.c.b16 %v2298, %v2297
          %v2314 = vpack.c.b16 %v2300, %v2299
          %v2315 = vpack.c.b16 %v2302, %v2301
          %v2316 = vpack.c.b16 %v2304, %v2303
          %v2317 = vpack.c.b16 %v2306, %v2305
          %v2318 = vpack.c.b16 %v2308, %v2307
          %v2319 = vpack.c.b16 %v2310, %v2309
          %v2320 = vpack.c.b16 %v2312, %v2311
          %2329 = vmatprep.subr.bf16.mxu0 0
          %2330 = vmatpush1.bf16.msra.mxu0 %v2320
          %2331 = vmatprep.subr.bf16.mxu0 0
          %2332 = vmatpush1.bf16.msra.mxu0 %v2319
          %2333 = vmatprep.subr.bf16.mxu0 0
          %2334 = vmatpush1.bf16.msra.mxu0 %v2318
          %2335 = vmatprep.subr.bf16.mxu0 0
          %2336 = vmatpush1.bf16.msra.mxu0 %v2317
          %2337 = vmatprep.subr.bf16.mxu0 0
          %2338 = vmatpush1.bf16.msra.mxu0 %v2316
          %2339 = vmatprep.subr.bf16.mxu0 0
          %2340 = vmatpush1.bf16.msra.mxu0 %v2315
          %2341 = vmatprep.subr.bf16.mxu0 0
          %2342 = vmatpush1.bf16.msra.mxu0 %v2314
          %2343 = vmatprep.subr.bf16.mxu0 0
          %2344 = vmatpush1.bf16.msra.mxu0 %v2313
          %2345 = vmatprep.subr.bf16.mxu0 0
          %2346 = vmatpush2.bf16.msra.mxu0 0
          %2347 = vmatprep.subr.bf16.mxu0 0
          %2348 = vmatpush2.bf16.msra.mxu0 0
          %2349 = vmatprep.subr.bf16.mxu0 0
          %2350 = vmatpush2.bf16.msra.mxu0 0
          %2351 = vmatprep.subr.bf16.mxu0 0
          %2352 = vmatpush2.bf16.msra.mxu0 0
          %2353 = vmatprep.subr.bf16.mxu0 0
          %2354 = vmatpush2.bf16.msra.mxu0 0
          %2355 = vmatprep.subr.bf16.mxu0 0
          %2356 = vmatpush2.bf16.msra.mxu0 0
          %2357 = vmatprep.subr.bf16.mxu0 0
          %2358 = vmatpush2.bf16.msra.mxu0 0
          %2359 = vmatprep.subr.bf16.mxu0 0
          %2360 = vmatpush2.bf16.msra.mxu0 0
          %2361 = vmatprep.mubr.bf16.mxu0 0
          %2362 = vmatmul.mubr.bf16.gmra.mxu0 %v2257
          %v2363 = vpop.f32.mrf.mxu0
          %v2364 = vadd.f32 %v2279, %v2363
          %v2365 = vpop.f32.mrf.mxu0
          %v2366 = vpop.f32.mrf.mxu0
          %v2367 = vpop.f32.mrf.mxu0
          %2368 = vdwg.mxu0
          %v2369 = vadd.f32 %v2256, %v2364
          %2370 = vst [vmem:[#allocation11] sm:$0xff] %v2369
        $region112: #{tpu_custom_call.1} parent=87 // pred_fallthru
          _
        %s2371 = sand.u32 %s440, 1
        %s2372 = scalar_lea.sflag [#allocation13], %s2371
        %s2373 = sand.u32 %s440, 1
        %s2374 = smul.addr %s2373, 128
        %s2375 = scalar_lea.vmem [#allocation12], %s2374
        // Predicated region
        $region113: #{tpu_custom_call.1} parent=87 // pred_check
          %p2376 = pneg %p424
        $region114: #{tpu_custom_call.1} parent=87 // pred_check_branch
          %2378 = sbr.rel (%p2376) target = $region116
        $region115: #{tpu_custom_call.1} parent=87 // pred_region
          %s2380 = ssub.s32 128, 128
          %2381 = vsyncadd [#allocation5], %s2380
          %s2383 = sshll.u32 [#allocation11], 4
          %s2384 = int_to_ptr.vmem [resolvable:$true] %s2383
          %2386 = dma.vmem_to_hbm [thread:$0]  %s2384, 128, %s17, [#allocation5]
        $region116: #{tpu_custom_call.1} parent=87 // pred_fallthru
          _
        // Predicated region
        $region117: #{tpu_custom_call.1} parent=87 // pred_check
          %p2387 = pneg %p450
        $region118: #{tpu_custom_call.1} parent=87 // pred_check_branch
          %2389 = sbr.rel (%p2387) target = $region120
        $region119: #{tpu_custom_call.1} parent=87 // pred_region
          %s2390 = smul.u32 16, %s39
          %s2392 = ssub.s32 2048, 2048
          %2393 = vsyncadd %s2372, %s2392
          %s2394 = smul.addr %s2390, 128
          %s2395 = scalar_lea.hbm %s18, %s2394
          %s2396 = sshll.u32 %s2375, 4
          %s2397 = int_to_ptr.vmem [resolvable:$true] %s2396
          %2402 = dma.vmem_to_hbm [thread:$0]  %s2397, 2048, %s2395, %s2372, 128, 128, 8
        $region120: #{tpu_custom_call.1} parent=87 // pred_fallthru
          _
        // Predicated region
        $region121: #{tpu_custom_call.1} parent=87 // pred_check
          %p2403 = pneg %p424
        $region122: #{tpu_custom_call.1} parent=87 // pred_check_branch
          %2405 = sbr.rel (%p2403) target = $region124
        $region123: #{tpu_custom_call.1} parent=87 // pred_region
          %2406 = dma.done [#allocation5], 128
        $region124: #{tpu_custom_call.1} parent=87 // pred_fallthru
          _
      $region88: #{tpu_custom_call.1} parent=5 // pred_fallthru
        _
      %p2407 = scmp.le.s32.totalorder 2, %s34
      // Predicated region
      $region125: #{tpu_custom_call.1} parent=5 // pred_check
        %p2408 = pneg %p2407
      $region126: #{tpu_custom_call.1} parent=5 // pred_check_branch
        %2410 = sbr.rel (%p2408) target = $region128
      $region127: #{tpu_custom_call.1} parent=5 // pred_region
        %s2411 = ssub.s32 %s34, 2
        // Predicated region
        $region129: #{tpu_custom_call.1} parent=127 // pred_check
          %p2412 = pneg %p456
        $region130: #{tpu_custom_call.1} parent=127 // pred_check_branch
          %2414 = sbr.rel (%p2412) target = $region132
        $region131: #{tpu_custom_call.1} parent=127 // pred_region
          %s2415 = sand.u32 %s441, 1
          %s2416 = scalar_lea.sflag [#allocation13], %s2415
          %s2417 = sand.u32 %s441, 1
          %s2418 = smul.addr %s2417, 128
          %s2419 = scalar_lea.vmem [#allocation12], %s2418
          %2420 = dma.done %s2416, 2048
        $region132: #{tpu_custom_call.1} parent=127 // pred_fallthru
          _
      $region128: #{tpu_custom_call.1} parent=5 // pred_fallthru
        _
    $region6: #{tpu_custom_call.1} parent=1 // loop_footer
      %s38 = sadd.s32 1, %s34
    $region7: #{tpu_custom_call.1} parent=1 // loop_footer_branch
      %33 = sbr.rel target = $region3
    $region8: #{tpu_custom_call.1} parent=1 // loop_exit
      _
    %2421 = vsyncpa [#allocation4], 1
    %s2422 = scalar_lea.sflag [#allocation4], 1
    %2423 = vsyncpa %s2422, 1
    %2424 = vsyncpa [#allocation7], 1
    %2425 = vsyncpa [#allocation10], 1
    %2426 = vsyncpa [#allocation5], 1
    %s2427 = scalar_lea.sflag [#allocation5], 1
    %2428 = vsyncpa %s2427, 1
    %2429 = vsyncpa [#allocation13], 1
    %s2430 = scalar_lea.sflag [#allocation13], 1
    %2431 = vsyncpa %s2430, 1

</llo_original>
